<compile_context>
chip_gen: v7x
topology: tpu7x:2x2x1
jax: 0.10.0
libtpu: 0.0.40
codegen_flags: <defaults>
</compile_context>

<pallas_src>
import jax
import jax.numpy as jnp
from jax.experimental import pallas as pl
from jax.experimental.pallas import tpu as pltpu


def _pam_kernel(x_ref, wq_ref, bq_ref, wk_ref, bk_ref, wv_ref, bv_ref, g_ref,
                out_ref):
    x = x_ref[0]                                                # (C, HW), lane-dense

    # ---- 1x1 conv projections (single GEMM each, N = HW = lane-dense) ------
    q = jnp.dot(wq_ref[...], x, preferred_element_type=jnp.float32) + bq_ref[...]  # (C8, HW)
    k = jnp.dot(wk_ref[...], x, preferred_element_type=jnp.float32) + bk_ref[...]  # (C8, HW)
    v = jnp.dot(wv_ref[...], x, preferred_element_type=jnp.float32) + bv_ref[...]  # (C,  HW)

    # ---- energy[i, j] = sum_c q[c, i] * k[c, j]  -> (HW, HW) ---------------
    energy = jax.lax.dot_general(
        q, k, dimension_numbers=(((0,), (0,)), ((), ())),
        preferred_element_type=jnp.float32)                     # (HW, HW)

    # ---- softmax along the last (lane) axis ---------------------------------
    m = jnp.max(energy, axis=-1, keepdims=True)                 # (HW, 1)
    e = jnp.exp(energy - m)
    attn = e / jnp.sum(e, axis=-1, keepdims=True)               # (HW, HW)

    # ---- out[c, i] = sum_j v[c, j] * attn[i, j]  (v @ attn^T) ---------------
    attn_out = jax.lax.dot_general(
        v, attn, dimension_numbers=(((1,), (1,)), ((), ())),
        preferred_element_type=jnp.float32)                     # (C, HW)

    # ---- gamma * out + x, lane-dense store ----------------------------------
    out_ref[0] = (g_ref[0, 0] * attn_out + x).astype(out_ref.dtype)


def pam_pallas(x_nchw, params):
    """x_nchw: (N, C, H, W) float32.  Returns (N, C, H, W)."""
    N, C, H, W = x_nchw.shape
    wq, bq, wk, bk, wv, bv, gamma = params
    C8 = wq.shape[0]
    HW = H * W

    xf = x_nchw.reshape(N, C, HW)                # free view, no HBM transpose
    g = gamma.reshape(1, 1).astype(jnp.float32)

    out = pl.pallas_call(
        _pam_kernel,
        out_shape=jax.ShapeDtypeStruct((N, C, HW), x_nchw.dtype),
        grid_spec=pltpu.PrefetchScalarGridSpec(
            num_scalar_prefetch=0,
            grid=(N,),
            in_specs=[
                pl.BlockSpec((1, C, HW), lambda n: (n, 0, 0)),   # x
                pl.BlockSpec((C8, C), lambda n: (0, 0)),         # Wq
                pl.BlockSpec((C8, 1), lambda n: (0, 0)),         # bq
                pl.BlockSpec((C8, C), lambda n: (0, 0)),         # Wk
                pl.BlockSpec((C8, 1), lambda n: (0, 0)),         # bk
                pl.BlockSpec((C, C), lambda n: (0, 0)),          # Wv
                pl.BlockSpec((C, 1), lambda n: (0, 0)),          # bv
                pl.BlockSpec((1, 1), lambda n: (0, 0)),          # gamma
            ],
            out_specs=pl.BlockSpec((1, C, HW), lambda n: (n, 0, 0)),
        ),
        compiler_params=pltpu.CompilerParams(
            dimension_semantics=("parallel",)),
    )(xf, wq, bq, wk, bk, wv, bv, g)

    return out.reshape(N, C, H, W)


def make_params(key, C):
    """Deterministic init matching PyTorch Conv2d(kernel_size=1) shapes.

    1x1 conv weights stored as (C_out, C_in); biases as (C_out, 1).
    """
    C8 = max(C // 8, 1)
    keys = jax.random.split(key, 6)

    def u(k, shape, fan_in):
        bound = 1.0 / jnp.sqrt(fan_in)
        return jax.random.uniform(k, shape, jnp.float32, -bound, bound)

    wq = u(keys[0], (C8, C), C)
    bq = u(keys[1], (C8, 1), C)
    wk = u(keys[2], (C8, C), C)
    bk = u(keys[3], (C8, 1), C)
    wv = u(keys[4], (C, C), C)
    bv = u(keys[5], (C, 1), C)
    # PyTorch initializes gamma to 0 (which would trivially bypass attention);
    # use a deterministic non-zero value so the attention path is exercised.
    gamma = jnp.array([0.5], jnp.float32)
    return (wq, bq, wk, bk, wv, bv, gamma)


def pam_reference(x_nchw, params):
    """Pure-JAX NCHW reference mirroring the PyTorch forward."""
    wq, bq, wk, bk, wv, bv, gamma = params
    N, C, H, W = x_nchw.shape
    HW = H * W
    xf = x_nchw.reshape(N, C, HW)                               # (N, C, HW)

    q = jnp.einsum('oc,nci->noi', wq, xf) + bq[None]            # (N, C8, HW)
    k = jnp.einsum('oc,nci->noi', wk, xf) + bk[None]            # (N, C8, HW)
    v = jnp.einsum('oc,nci->noi', wv, xf) + bv[None]            # (N, C,  HW)

    energy = jnp.einsum('nci,ncj->nij', q, k)                   # (N, HW, HW)
    attn = jax.nn.softmax(energy, axis=-1)
    out = jnp.einsum('ncj,nij->nci', v, attn)                   # (N, C, HW)
    out = gamma.reshape(()) * out + xf
    return out.reshape(N, C, H, W)


if __name__ == "__main__":
    # C must be >= 8 (query/key convs output C//8 channels), so use C=32.
    N, C, H, W = 2, 32, 16, 16
    key = jax.random.PRNGKey(0)
    kx, kp = jax.random.split(key)
    x = jax.random.normal(kx, (N, C, H, W), jnp.float32)
    params = make_params(kp, C)

    out = pam_pallas(x, params)
    out = jax.block_until_ready(out)

    ref = pam_reference(x, params)
    assert out.shape == (N, C, H, W)
    assert jnp.allclose(out, ref, atol=2e-3, rtol=1e-3), \
        f"max abs err {jnp.max(jnp.abs(out - ref))}"

    print("KERNEL_OK")
</pallas_src>

<mosaic_0001>
module attributes {stable_mosaic.version = 11 : i64} {
  func.func @_pam_kernel(%arg0: i32, %arg1: memref<1x32x256xf32, #tpu.memory_space<vmem>>, %arg2: memref<4x32xf32, #tpu.memory_space<vmem>>, %arg3: memref<4x1xf32, #tpu.memory_space<vmem>>, %arg4: memref<4x32xf32, #tpu.memory_space<vmem>>, %arg5: memref<4x1xf32, #tpu.memory_space<vmem>>, %arg6: memref<32x32xf32, #tpu.memory_space<vmem>>, %arg7: memref<32x1xf32, #tpu.memory_space<vmem>>, %arg8: memref<1x1xf32, #tpu.memory_space<vmem>>, %arg9: memref<1x32x256xf32, #tpu.memory_space<vmem>>) attributes {dimension_semantics = [#tpu.dimension_semantics<parallel>], iteration_bounds = array<i64: 2>, scalar_prefetch = 0 : i64, scratch_operands = 0 : i64, tpu.core_type = #tpu.core_type<tc>, window_params = [{transform_indices = @transform_0, window_bounds = array<i64: 1, 32, 256>}, {pipeline_mode = #tpu.pipeline_mode<synchronous>, transform_indices = @transform_1, window_bounds = array<i64: 4, 32>}, {pipeline_mode = #tpu.pipeline_mode<synchronous>, transform_indices = @transform_2, window_bounds = array<i64: 4, 1>}, {pipeline_mode = #tpu.pipeline_mode<synchronous>, transform_indices = @transform_3, window_bounds = array<i64: 4, 32>}, {pipeline_mode = #tpu.pipeline_mode<synchronous>, transform_indices = @transform_4, window_bounds = array<i64: 4, 1>}, {pipeline_mode = #tpu.pipeline_mode<synchronous>, transform_indices = @transform_5, window_bounds = array<i64: 32, 32>}, {pipeline_mode = #tpu.pipeline_mode<synchronous>, transform_indices = @transform_6, window_bounds = array<i64: 32, 1>}, {pipeline_mode = #tpu.pipeline_mode<synchronous>, transform_indices = @transform_7, window_bounds = array<i64: 1, 1>}, {transform_indices = @transform_8, window_bounds = array<i64: 1, 32, 256>}]} {
    %c0 = arith.constant 0 : index
    %c0_0 = arith.constant 0 : index
    %c0_1 = arith.constant 0 : index
    %0 = vector.load %arg1[%c0, %c0_0, %c0_1] : memref<1x32x256xf32, #tpu.memory_space<vmem>>, vector<1x32x256xf32>
    %1 = vector.shape_cast %0 : vector<1x32x256xf32> to vector<32x256xf32>
    %c0_2 = arith.constant 0 : index
    %c0_3 = arith.constant 0 : index
    %2 = vector.load %arg2[%c0_2, %c0_3] : memref<4x32xf32, #tpu.memory_space<vmem>>, vector<4x32xf32>
    %cst = arith.constant dense<0.000000e+00> : vector<4x256xf32>
    %3 = tpu.matmul %2, %1, %cst {dimension_numbers = #tpu.dot_dimension_numbers<[1], [0], [0], [1], [0, 0, 1, 1], [], []>} : vector<4x32xf32>, vector<32x256xf32>, vector<4x256xf32> -> vector<4x256xf32>
    %c0_4 = arith.constant 0 : index
    %c0_5 = arith.constant 0 : index
    %4 = vector.load %arg3[%c0_4, %c0_5] : memref<4x1xf32, #tpu.memory_space<vmem>>, vector<4x1xf32>
    %5 = vector.broadcast %4 : vector<4x1xf32> to vector<4x256xf32>
    %6 = arith.addf %3, %5 : vector<4x256xf32>
    %c0_6 = arith.constant 0 : index
    %c0_7 = arith.constant 0 : index
    %7 = vector.load %arg4[%c0_6, %c0_7] : memref<4x32xf32, #tpu.memory_space<vmem>>, vector<4x32xf32>
    %cst_8 = arith.constant dense<0.000000e+00> : vector<4x256xf32>
    %8 = tpu.matmul %7, %1, %cst_8 {dimension_numbers = #tpu.dot_dimension_numbers<[1], [0], [0], [1], [0, 0, 1, 1], [], []>} : vector<4x32xf32>, vector<32x256xf32>, vector<4x256xf32> -> vector<4x256xf32>
    %c0_9 = arith.constant 0 : index
    %c0_10 = arith.constant 0 : index
    %9 = vector.load %arg5[%c0_9, %c0_10] : memref<4x1xf32, #tpu.memory_space<vmem>>, vector<4x1xf32>
    %10 = vector.broadcast %9 : vector<4x1xf32> to vector<4x256xf32>
    %11 = arith.addf %8, %10 : vector<4x256xf32>
    %c0_11 = arith.constant 0 : index
    %c0_12 = arith.constant 0 : index
    %12 = vector.load %arg6[%c0_11, %c0_12] : memref<32x32xf32, #tpu.memory_space<vmem>>, vector<32x32xf32>
    %cst_13 = arith.constant dense<0.000000e+00> : vector<32x256xf32>
    %13 = tpu.matmul %12, %1, %cst_13 {dimension_numbers = #tpu.dot_dimension_numbers<[1], [0], [0], [1], [0, 0, 1, 1], [], []>} : vector<32x32xf32>, vector<32x256xf32>, vector<32x256xf32> -> vector<32x256xf32>
    %c0_14 = arith.constant 0 : index
    %c0_15 = arith.constant 0 : index
    %14 = vector.load %arg7[%c0_14, %c0_15] : memref<32x1xf32, #tpu.memory_space<vmem>>, vector<32x1xf32>
    %15 = vector.broadcast %14 : vector<32x1xf32> to vector<32x256xf32>
    %16 = arith.addf %13, %15 : vector<32x256xf32>
    %cst_16 = arith.constant dense<0.000000e+00> : vector<256x256xf32>
    %17 = tpu.matmul %6, %11, %cst_16 {dimension_numbers = #tpu.dot_dimension_numbers<[0], [0], [1], [1], [0, 1, 1, 1], [], []>} : vector<4x256xf32>, vector<4x256xf32>, vector<256x256xf32> -> vector<256x256xf32>
    %cst_17 = arith.constant dense<0xFF800000> : vector<256xf32>
    %18 = vector.multi_reduction <maximumf>, %17, %cst_17 [1] : vector<256x256xf32> to vector<256xf32>
    %19 = vector.shape_cast %18 : vector<256xf32> to vector<256x1xf32>
    %20 = vector.broadcast %19 : vector<256x1xf32> to vector<256x256xf32>
    %21 = arith.subf %17, %20 : vector<256x256xf32>
    %22 = math.exp %21 : vector<256x256xf32>
    %cst_18 = arith.constant dense<0.000000e+00> : vector<256xf32>
    %23 = vector.multi_reduction <add>, %22, %cst_18 [1] : vector<256x256xf32> to vector<256xf32>
    %24 = vector.shape_cast %23 : vector<256xf32> to vector<256x1xf32>
    %25 = vector.broadcast %24 : vector<256x1xf32> to vector<256x256xf32>
    %26 = arith.divf %22, %25 : vector<256x256xf32>
    %cst_19 = arith.constant dense<0.000000e+00> : vector<32x256xf32>
    %27 = tpu.matmul %16, %26, %cst_19 {dimension_numbers = #tpu.dot_dimension_numbers<[1], [1], [0], [0], [0, 0, 1, 0], [], []>} : vector<32x256xf32>, vector<256x256xf32>, vector<32x256xf32> -> vector<32x256xf32>
    %c0_20 = arith.constant 0 : index
    %c0_21 = arith.constant 0 : index
    %28 = vector.load %arg8[%c0_20, %c0_21] : memref<1x1xf32, #tpu.memory_space<vmem>>, vector<1x1xf32>
    %29 = vector.extract %28[0, 0] : f32 from vector<1x1xf32>
    %30 = vector.broadcast %29 : f32 to vector<32x256xf32>
    %31 = arith.mulf %30, %27 : vector<32x256xf32>
    %32 = arith.addf %31, %1 : vector<32x256xf32>
    %c0_22 = arith.constant 0 : index
    %c0_23 = arith.constant 0 : index
    %c0_24 = arith.constant 0 : index
    %33 = vector.load %arg9[%c0_22, %c0_23, %c0_24] : memref<1x32x256xf32, #tpu.memory_space<vmem>>, vector<1x32x256xf32>
    %34 = vector.shape_cast %33 : vector<1x32x256xf32> to vector<32x256xf32>
    %35 = vector.shape_cast %32 : vector<32x256xf32> to vector<1x32x256xf32>
    tpu.vector_store %arg9[%c0_22, %c0_23, %c0_24], %35 {strides = array<i32>} : memref<1x32x256xf32, #tpu.memory_space<vmem>>, vector<1x32x256xf32>,
    return
  }
  func.func @transform_0(%arg0: i32) -> (i32, i32, i32) {
    %c0_i32 = arith.constant 0 : i32
    %c0_i32_0 = arith.constant 0 : i32
    %c0_i32_1 = arith.constant 0 : i32
    return %arg0, %c0_i32, %c0_i32_0 : i32, i32, i32
  }
  func.func @transform_1(%arg0: i32) -> (i32, i32) {
    %c0_i32 = arith.constant 0 : i32
    %c0_i32_0 = arith.constant 0 : i32
    %c0_i32_1 = arith.constant 0 : i32
    return %c0_i32, %c0_i32_0 : i32, i32
  }
  func.func @transform_2(%arg0: i32) -> (i32, i32) {
    %c0_i32 = arith.constant 0 : i32
    %c0_i32_0 = arith.constant 0 : i32
    %c0_i32_1 = arith.constant 0 : i32
    return %c0_i32, %c0_i32_0 : i32, i32
  }
  func.func @transform_3(%arg0: i32) -> (i32, i32) {
    %c0_i32 = arith.constant 0 : i32
    %c0_i32_0 = arith.constant 0 : i32
    %c0_i32_1 = arith.constant 0 : i32
    return %c0_i32, %c0_i32_0 : i32, i32
  }
  func.func @transform_4(%arg0: i32) -> (i32, i32) {
    %c0_i32 = arith.constant 0 : i32
    %c0_i32_0 = arith.constant 0 : i32
    %c0_i32_1 = arith.constant 0 : i32
    return %c0_i32, %c0_i32_0 : i32, i32
  }
  func.func @transform_5(%arg0: i32) -> (i32, i32) {
    %c0_i32 = arith.constant 0 : i32
    %c0_i32_0 = arith.constant 0 : i32
    %c0_i32_1 = arith.constant 0 : i32
    return %c0_i32, %c0_i32_0 : i32, i32
  }
  func.func @transform_6(%arg0: i32) -> (i32, i32) {
    %c0_i32 = arith.constant 0 : i32
    %c0_i32_0 = arith.constant 0 : i32
    %c0_i32_1 = arith.constant 0 : i32
    return %c0_i32, %c0_i32_0 : i32, i32
  }
  func.func @transform_7(%arg0: i32) -> (i32, i32) {
    %c0_i32 = arith.constant 0 : i32
    %c0_i32_0 = arith.constant 0 : i32
    %c0_i32_1 = arith.constant 0 : i32
    return %c0_i32, %c0_i32_0 : i32, i32
  }
  func.func @transform_8(%arg0: i32) -> (i32, i32, i32) {
    %c0_i32 = arith.constant 0 : i32
    %c0_i32_0 = arith.constant 0 : i32
    %c0_i32_1 = arith.constant 0 : i32
    return %arg0, %c0_i32, %c0_i32_0 : i32, i32, i32
  }
}

</mosaic_0001>

<llo_original>
// kernel: tpu_custom_call.1
$region0: #{tpu_custom_call.1}
  #allocation0 [shape = 'u32[]', space=smem, size = 0x4, offset = 0x4, fixed_abs, tag = 'smem constant byte address 0x4 - core index']
  #allocation1 [shape = 'u32[144,128]{1,0:T(1,128)}', space=vmem, size = 0x12000, scoped, tag = 'internal scratch']
  #allocation2 [shape = 'f32[1,1]{1,0:T(1,128)S(1)}', space=vmem, size = 0x200, scoped, tag = 'scoped memory for tpu_custom_call.1']
  %s0 = inlined_call_operand.hbm [shape: f32[2,32,256], index: 0, kind: input, shape index: {}]
  %s1 = inlined_call_operand.vmem [shape: f32[4,32], index: 1, kind: input, shape index: {}]
  %s2 = inlined_call_operand.vmem [shape: f32[4,1], index: 2, kind: input, shape index: {}]
  %s3 = inlined_call_operand.vmem [shape: f32[4,32], index: 3, kind: input, shape index: {}]
  %s4 = inlined_call_operand.vmem [shape: f32[4,1], index: 4, kind: input, shape index: {}]
  %s5 = inlined_call_operand.vmem [shape: f32[32,32], index: 5, kind: input, shape index: {}]
  %s6 = inlined_call_operand.vmem [shape: f32[32,1], index: 6, kind: input, shape index: {}]
  %s7 = inlined_call_operand.<no memory space> [shape: f32[1,1], index: 7, kind: input, shape index: {}]
  %s8 = inlined_call_operand.hbm [shape: f32[2,32,256], index: 8, kind: output, shape index: {}]
  %s9 = sld [smem:[#allocation0]]
  $region69: #{tpu_custom_call.1} parent=0
    _
  %s11 = ssub.s32 1, %s9
  %s12 = scalar_select 0, %s11, %s9
  %v13 = vstv %s7
  %14 = vst [vmem:[#allocation2] sm:$0x1] %v13
  $region1: #{tpu_custom_call.1} parent=0
    #allocation3 [shape = 'u8[65536]{0}', space=vmem, size = 0x10000, scoped, tag = 'input window, operand 0']
    #allocation4 [shape = 's32[2]{0}', space=sflag, size = 0x8, scoped, tag = 'scoped memory for tpu_custom_call.1']
    #allocation5 [shape = 's32[2]{0}', space=sflag, size = 0x8, scoped, tag = 'scoped memory for tpu_custom_call.1']
    #allocation6 [shape = 'u8[65536]{0}', space=vmem, size = 0x10000, scoped, tag = 'output window, operand 0']
    %15 = vsyncpa [#allocation4], 0
    %s16 = scalar_lea.sflag [#allocation4], 1
    %17 = vsyncpa %s16, 0
    %18 = vsyncpa [#allocation5], 0
    %s19 = scalar_lea.sflag [#allocation5], 1
    %20 = vsyncpa %s19, 0
    loop: start=0, step=1, limit=4
    $region2: #{tpu_custom_call.1} parent=1 // loop_pre_header
      _
    $region3: #{tpu_custom_call.1} parent=1 // loop_header
      %s22 = sphi 0, %s26
      %p23 = scmp.ge.s32.totalorder %s22, 4
      %s32 = sphi 0, %s34
      %s35 = sphi 0, %s32
      %s36 = sphi 0, %s35
      %s52 = sphi 0, %s36
      %s56 = sphi 0, %s56
      %s58 = sphi 0, %s56
      %s59 = sphi 0, %s58
      %s73 = sphi 0, %s59
      %s77 = sphi 0, %s77
      %s79 = sphi 0, %s77
      %s80 = sphi 0, %s79
      %s94 = sphi 0, %s80
      %s98 = sphi 0, %s98
      %s100 = sphi 0, %s98
      %s101 = sphi 0, %s100
      %s115 = sphi 0, %s101
      %s119 = sphi 0, %s119
      %s121 = sphi 0, %s119
      %s122 = sphi 0, %s121
      %s136 = sphi 0, %s122
      %s140 = sphi 0, %s140
      %s142 = sphi 0, %s140
      %s143 = sphi 0, %s142
      %s157 = sphi 0, %s143
      %s161 = sphi 0, %s161
      %s163 = sphi 0, %s161
      %s164 = sphi 0, %s163
      %s178 = sphi 0, %s164
      %s182 = sphi 0, %s182
      %s184 = sphi 0, %s182
      %s185 = sphi 0, %s184
      %s199 = sphi 0, %s185
      %s205 = sphi 0, %s207
      %s208 = sphi 0, %s205
      %s209 = sphi 0, %s208
      %s225 = sphi 0, %s209
    $region4: #{tpu_custom_call.1} parent=1 // loop_header_branch
      %25 = sbr.rel (%p23) target = $region8
    $region5: #{tpu_custom_call.1} parent=1 // loop_body
      %s27 = ssub.s32 %s22, 1
      %s28 = ssub.s32 %s22, 2
      %s29 = sadd.s32 %s22, 1
      %s30 = ssub.s32 %s22, %s29
      %p31 = scmp.eq.s32.totalorder %s30, 0
      %s33 = sadd.s32 %s32, 1
      %s34 = scalar_select %p31, %s32, %s33
      %p37 = pneg %p31
      %p38 = scmp.eq.s32.totalorder %s22, 1
      %p39 = por %p37, %p38
      %p40 = scmp.ne.s32.totalorder %s32, %s35
      %p41 = scmp.eq.s32.totalorder %s22, 0
      %p42 = por %p40, %p41
      %p43 = scmp.ne.s32.totalorder %s32, %s35
      %p44 = scmp.eq.s32.totalorder %s27, 1
      %p45 = por %p43, %p44
      %p46 = scmp.ne.s32.totalorder %s35, %s36
      %p47 = scmp.eq.s32.totalorder %s27, 0
      %p48 = por %p46, %p47
      %p49 = scmp.ne.s32.totalorder %s35, %s36
      %p50 = scmp.eq.s32.totalorder %s28, 1
      %p51 = por %p49, %p50
      %p53 = scmp.ne.s32.totalorder %s36, %s52
      %p54 = scmp.eq.s32.totalorder %s28, 0
      %p55 = por %p53, %p54
      %s57 = sadd.s32 %s56, 1
      %p60 = scmp.eq.s32.totalorder %s22, 1
      %p61 = scmp.ne.s32.totalorder %s56, %s58
      %p62 = scmp.eq.s32.totalorder %s22, 0
      %p63 = por %p61, %p62
      %p64 = scmp.ne.s32.totalorder %s56, %s58
      %p65 = scmp.eq.s32.totalorder %s27, 1
      %p66 = por %p64, %p65
      %p67 = scmp.ne.s32.totalorder %s58, %s59
      %p68 = scmp.eq.s32.totalorder %s27, 0
      %p69 = por %p67, %p68
      %p70 = scmp.ne.s32.totalorder %s58, %s59
      %p71 = scmp.eq.s32.totalorder %s28, 1
      %p72 = por %p70, %p71
      %p74 = scmp.ne.s32.totalorder %s59, %s73
      %p75 = scmp.eq.s32.totalorder %s28, 0
      %p76 = por %p74, %p75
      %s78 = sadd.s32 %s77, 1
      %p81 = scmp.eq.s32.totalorder %s22, 1
      %p82 = scmp.ne.s32.totalorder %s77, %s79
      %p83 = scmp.eq.s32.totalorder %s22, 0
      %p84 = por %p82, %p83
      %p85 = scmp.ne.s32.totalorder %s77, %s79
      %p86 = scmp.eq.s32.totalorder %s27, 1
      %p87 = por %p85, %p86
      %p88 = scmp.ne.s32.totalorder %s79, %s80
      %p89 = scmp.eq.s32.totalorder %s27, 0
      %p90 = por %p88, %p89
      %p91 = scmp.ne.s32.totalorder %s79, %s80
      %p92 = scmp.eq.s32.totalorder %s28, 1
      %p93 = por %p91, %p92
      %p95 = scmp.ne.s32.totalorder %s80, %s94
      %p96 = scmp.eq.s32.totalorder %s28, 0
      %p97 = por %p95, %p96
      %s99 = sadd.s32 %s98, 1
      %p102 = scmp.eq.s32.totalorder %s22, 1
      %p103 = scmp.ne.s32.totalorder %s98, %s100
      %p104 = scmp.eq.s32.totalorder %s22, 0
      %p105 = por %p103, %p104
      %p106 = scmp.ne.s32.totalorder %s98, %s100
      %p107 = scmp.eq.s32.totalorder %s27, 1
      %p108 = por %p106, %p107
      %p109 = scmp.ne.s32.totalorder %s100, %s101
      %p110 = scmp.eq.s32.totalorder %s27, 0
      %p111 = por %p109, %p110
      %p112 = scmp.ne.s32.totalorder %s100, %s101
      %p113 = scmp.eq.s32.totalorder %s28, 1
      %p114 = por %p112, %p113
      %p116 = scmp.ne.s32.totalorder %s101, %s115
      %p117 = scmp.eq.s32.totalorder %s28, 0
      %p118 = por %p116, %p117
      %s120 = sadd.s32 %s119, 1
      %p123 = scmp.eq.s32.totalorder %s22, 1
      %p124 = scmp.ne.s32.totalorder %s119, %s121
      %p125 = scmp.eq.s32.totalorder %s22, 0
      %p126 = por %p124, %p125
      %p127 = scmp.ne.s32.totalorder %s119, %s121
      %p128 = scmp.eq.s32.totalorder %s27, 1
      %p129 = por %p127, %p128
      %p130 = scmp.ne.s32.totalorder %s121, %s122
      %p131 = scmp.eq.s32.totalorder %s27, 0
      %p132 = por %p130, %p131
      %p133 = scmp.ne.s32.totalorder %s121, %s122
      %p134 = scmp.eq.s32.totalorder %s28, 1
      %p135 = por %p133, %p134
      %p137 = scmp.ne.s32.totalorder %s122, %s136
      %p138 = scmp.eq.s32.totalorder %s28, 0
      %p139 = por %p137, %p138
      %s141 = sadd.s32 %s140, 1
      %p144 = scmp.eq.s32.totalorder %s22, 1
      %p145 = scmp.ne.s32.totalorder %s140, %s142
      %p146 = scmp.eq.s32.totalorder %s22, 0
      %p147 = por %p145, %p146
      %p148 = scmp.ne.s32.totalorder %s140, %s142
      %p149 = scmp.eq.s32.totalorder %s27, 1
      %p150 = por %p148, %p149
      %p151 = scmp.ne.s32.totalorder %s142, %s143
      %p152 = scmp.eq.s32.totalorder %s27, 0
      %p153 = por %p151, %p152
      %p154 = scmp.ne.s32.totalorder %s142, %s143
      %p155 = scmp.eq.s32.totalorder %s28, 1
      %p156 = por %p154, %p155
      %p158 = scmp.ne.s32.totalorder %s143, %s157
      %p159 = scmp.eq.s32.totalorder %s28, 0
      %p160 = por %p158, %p159
      %s162 = sadd.s32 %s161, 1
      %p165 = scmp.eq.s32.totalorder %s22, 1
      %p166 = scmp.ne.s32.totalorder %s161, %s163
      %p167 = scmp.eq.s32.totalorder %s22, 0
      %p168 = por %p166, %p167
      %p169 = scmp.ne.s32.totalorder %s161, %s163
      %p170 = scmp.eq.s32.totalorder %s27, 1
      %p171 = por %p169, %p170
      %p172 = scmp.ne.s32.totalorder %s163, %s164
      %p173 = scmp.eq.s32.totalorder %s27, 0
      %p174 = por %p172, %p173
      %p175 = scmp.ne.s32.totalorder %s163, %s164
      %p176 = scmp.eq.s32.totalorder %s28, 1
      %p177 = por %p175, %p176
      %p179 = scmp.ne.s32.totalorder %s164, %s178
      %p180 = scmp.eq.s32.totalorder %s28, 0
      %p181 = por %p179, %p180
      %s183 = sadd.s32 %s182, 1
      %p186 = scmp.eq.s32.totalorder %s22, 1
      %p187 = scmp.ne.s32.totalorder %s182, %s184
      %p188 = scmp.eq.s32.totalorder %s22, 0
      %p189 = por %p187, %p188
      %p190 = scmp.ne.s32.totalorder %s182, %s184
      %p191 = scmp.eq.s32.totalorder %s27, 1
      %p192 = por %p190, %p191
      %p193 = scmp.ne.s32.totalorder %s184, %s185
      %p194 = scmp.eq.s32.totalorder %s27, 0
      %p195 = por %p193, %p194
      %p196 = scmp.ne.s32.totalorder %s184, %s185
      %p197 = scmp.eq.s32.totalorder %s28, 1
      %p198 = por %p196, %p197
      %p200 = scmp.ne.s32.totalorder %s185, %s199
      %p201 = scmp.eq.s32.totalorder %s28, 0
      %p202 = por %p200, %p201
      %s203 = ssub.s32 %s22, %s29
      %p204 = scmp.eq.s32.totalorder %s203, 0
      %s206 = sadd.s32 %s205, 1
      %s207 = scalar_select %p204, %s205, %s206
      %p210 = pneg %p204
      %p211 = scmp.eq.s32.totalorder %s22, 1
      %p212 = por %p210, %p211
      %p213 = scmp.ne.s32.totalorder %s205, %s208
      %p214 = scmp.eq.s32.totalorder %s22, 0
      %p215 = por %p213, %p214
      %p216 = scmp.ne.s32.totalorder %s205, %s208
      %p217 = scmp.eq.s32.totalorder %s27, 1
      %p218 = por %p216, %p217
      %p219 = scmp.ne.s32.totalorder %s208, %s209
      %p220 = scmp.eq.s32.totalorder %s27, 0
      %p221 = por %p219, %p220
      %p222 = scmp.ne.s32.totalorder %s208, %s209
      %p223 = scmp.eq.s32.totalorder %s28, 1
      %p224 = por %p222, %p223
      %p226 = scmp.ne.s32.totalorder %s209, %s225
      %p227 = scmp.eq.s32.totalorder %s28, 0
      %p228 = por %p226, %p227
      %p229 = scmp.le.s32.totalorder 1, %s22
      %p230 = scmp.lt.s32.totalorder %s22, 3
      %p231 = pnand %p229, %p230
      %p232 = pneg %p231
      // Predicated region
      $region9: #{tpu_custom_call.1} parent=5 // pred_check
        _
      $region10: #{tpu_custom_call.1} parent=5 // pred_check_branch
        %234 = sbr.rel (%p231) target = $region12
      $region11: #{tpu_custom_call.1} parent=5 // pred_region
        %s235 = ssub.s32 %s22, 1
        // Predicated region
        $region13: #{tpu_custom_call.1} parent=11 // pred_check
          %p236 = pneg %p69
        $region14: #{tpu_custom_call.1} parent=11 // pred_check_branch
          %238 = sbr.rel (%p236) target = $region16
        $region15: #{tpu_custom_call.1} parent=11 // pred_region
          _
        $region16: #{tpu_custom_call.1} parent=11 // pred_fallthru
          _
        // Predicated region
        $region17: #{tpu_custom_call.1} parent=11 // pred_check
          %p239 = pneg %p90
        $region18: #{tpu_custom_call.1} parent=11 // pred_check_branch
          %241 = sbr.rel (%p239) target = $region20
        $region19: #{tpu_custom_call.1} parent=11 // pred_region
          _
        $region20: #{tpu_custom_call.1} parent=11 // pred_fallthru
          _
        // Predicated region
        $region21: #{tpu_custom_call.1} parent=11 // pred_check
          %p242 = pneg %p111
        $region22: #{tpu_custom_call.1} parent=11 // pred_check_branch
          %244 = sbr.rel (%p242) target = $region24
        $region23: #{tpu_custom_call.1} parent=11 // pred_region
          _
        $region24: #{tpu_custom_call.1} parent=11 // pred_fallthru
          _
        // Predicated region
        $region25: #{tpu_custom_call.1} parent=11 // pred_check
          %p245 = pneg %p132
        $region26: #{tpu_custom_call.1} parent=11 // pred_check_branch
          %247 = sbr.rel (%p245) target = $region28
        $region27: #{tpu_custom_call.1} parent=11 // pred_region
          _
        $region28: #{tpu_custom_call.1} parent=11 // pred_fallthru
          _
        // Predicated region
        $region29: #{tpu_custom_call.1} parent=11 // pred_check
          %p248 = pneg %p153
        $region30: #{tpu_custom_call.1} parent=11 // pred_check_branch
          %250 = sbr.rel (%p248) target = $region32
        $region31: #{tpu_custom_call.1} parent=11 // pred_region
          _
        $region32: #{tpu_custom_call.1} parent=11 // pred_fallthru
          _
        // Predicated region
        $region33: #{tpu_custom_call.1} parent=11 // pred_check
          %p251 = pneg %p174
        $region34: #{tpu_custom_call.1} parent=11 // pred_check_branch
          %253 = sbr.rel (%p251) target = $region36
        $region35: #{tpu_custom_call.1} parent=11 // pred_region
          _
        $region36: #{tpu_custom_call.1} parent=11 // pred_fallthru
          _
        // Predicated region
        $region37: #{tpu_custom_call.1} parent=11 // pred_check
          %p254 = pneg %p195
        $region38: #{tpu_custom_call.1} parent=11 // pred_check_branch
          %256 = sbr.rel (%p254) target = $region40
        $region39: #{tpu_custom_call.1} parent=11 // pred_region
          _
        $region40: #{tpu_custom_call.1} parent=11 // pred_fallthru
          _
      $region12: #{tpu_custom_call.1} parent=5 // pred_fallthru
        _
      %p257 = scmp.lt.s32.totalorder %s22, 2
      // Predicated region
      $region41: #{tpu_custom_call.1} parent=5 // pred_check
        %p258 = pneg %p257
      $region42: #{tpu_custom_call.1} parent=5 // pred_check_branch
        %260 = sbr.rel (%p258) target = $region44
      $region43: #{tpu_custom_call.1} parent=5 // pred_region
        // Predicated region
        $region45: #{tpu_custom_call.1} parent=43 // pred_check
          %p261 = pneg %p42
        $region46: #{tpu_custom_call.1} parent=43 // pred_check_branch
          %263 = sbr.rel (%p261) target = $region48
        $region47: #{tpu_custom_call.1} parent=43 // pred_region
          %s264 = sand.u32 %s32, 1
          %s265 = scalar_lea.sflag [#allocation4], %s264
          %s266 = sand.u32 %s32, 1
          %s267 = smul.addr %s266, 64
          %s268 = scalar_lea.vmem [#allocation3], %s267
          %s270 = ssub.s32 1024, 1024
          %271 = vsyncadd %s265, %s270
          %s272 = smul.addr %s22, 8
          %s273 = smul.addr %s272, 128
          %s274 = scalar_lea.hbm %s0, %s273
          %s275 = sshll.u32 %s268, 4
          %s276 = int_to_ptr.vmem [resolvable:$true] %s275
          %281 = dma.hbm_to_vmem [thread:$0]  %s274, 1024, %s276, %s265, 256, 256, 16
        $region48: #{tpu_custom_call.1} parent=43 // pred_fallthru
          _
      $region44: #{tpu_custom_call.1} parent=5 // pred_fallthru
        _
      %p282 = scmp.le.s32.totalorder 1, %s22
      %p283 = scmp.lt.s32.totalorder %s22, 3
      %p284 = pnand %p282, %p283
      %p285 = pneg %p284
      // Predicated region
      $region49: #{tpu_custom_call.1} parent=5 // pred_check
        _
      $region50: #{tpu_custom_call.1} parent=5 // pred_check_branch
        %287 = sbr.rel (%p284) target = $region52
      $region51: #{tpu_custom_call.1} parent=5 // pred_region
        %s288 = ssub.s32 %s22, 1
        %s289 = sand.u32 %s35, 1
        %s290 = scalar_lea.sflag [#allocation4], %s289
        %s291 = sand.u32 %s35, 1
        %s292 = smul.addr %s291, 64
        %s293 = scalar_lea.vmem [#allocation3], %s292
        // Predicated region
        $region53: #{tpu_custom_call.1} parent=51 // pred_check
          %p294 = pneg %p48
        $region54: #{tpu_custom_call.1} parent=51 // pred_check_branch
          %296 = sbr.rel (%p294) target = $region56
        $region55: #{tpu_custom_call.1} parent=51 // pred_region
          %297 = dma.done %s290, 1024
        $region56: #{tpu_custom_call.1} parent=51 // pred_fallthru
          _
        %s298 = sand.u32 %s35, 1
        %s299 = scalar_lea.sflag [#allocation4], %s298
        %s300 = sand.u32 %s35, 1
        %s301 = smul.addr %s300, 64
        %s302 = scalar_lea.vmem [#allocation3], %s301
        %p303 = pneg %p48
        %p304 = pneg %p45
        %p305 = pneg %p69
        %p306 = pneg %p66
        %p307 = pneg %p90
        %p308 = pneg %p87
        %p309 = pneg %p111
        %p310 = pneg %p108
        %p311 = pneg %p132
        %p312 = pneg %p129
        %p313 = pneg %p153
        %p314 = pneg %p150
        %p315 = pneg %p174
        %p316 = pneg %p171
        %p317 = pneg %p195
        %p318 = pneg %p192
        %p319 = pneg %p221
        %p320 = pneg %p218
        %s321 = sand.u32 %s208, 1
        %s322 = scalar_lea.sflag [#allocation5], %s321
        %s323 = sand.u32 %s208, 1
        %s324 = smul.addr %s323, 64
        %s325 = scalar_lea.vmem [#allocation6], %s324
        %v326 = vld [vmem:[%s293] sm:$0xff]
        %v327 = vld [vmem:[%s293 + $0x8] sm:$0xff]
        %v328 = vld [vmem:[%s293 + $0x10] sm:$0xff]
        %v329 = vld [vmem:[%s293 + $0x18] sm:$0xff]
        %v330 = vld [vmem:[%s293 + $0x20] sm:$0xff]
        %v331 = vld [vmem:[%s293 + $0x28] sm:$0xff]
        %v332 = vld [vmem:[%s293 + $0x30] sm:$0xff]
        %v333 = vld [vmem:[%s293 + $0x38] sm:$0xff]
        %v334 = vld [vmem:[%s1] sm:$0xf]
        %v335 = vld [vmem:[%s2] sm:$0xf]
        %337 = vset.pattern.permute.xlu0 0
        %338 = vperm.xlu0 %337, %v335
        %v339 = vpop.permute.xlu0 %338
        %vm341 = vcmask 261120
        %v343 = vsel %vm341, %v334, 0
        %345 = vmatprep.subr.mxu0 %v327
        %346 = vmatpush1.msra.mxu0 %v326
        %347 = vmatprep.subr.mxu0 %v329
        %348 = vmatpush1.msra.mxu0 %v328
        %349 = vmatprep.subr.mxu0 %v331
        %350 = vmatpush1.msra.mxu0 %v330
        %351 = vmatprep.subr.mxu0 %v333
        %352 = vmatpush1.msra.mxu0 %v332
        %353 = vmatprep.subr.mxu0 0.0
        %354 = vmatpush1.msra.mxu0 0.0
        %355 = vmatprep.subr.mxu0 0.0
        %356 = vmatpush1.msra.mxu0 0.0
        %357 = vmatprep.subr.mxu0 0.0
        %358 = vmatpush1.msra.mxu0 0.0
        %359 = vmatprep.subr.mxu0 0.0
        %360 = vmatpush1.msra.mxu0 0.0
        %361 = vmatprep.subr.mxu0 0.0
        %362 = vmatpush1.msra.mxu0 0.0
        %363 = vmatprep.subr.mxu0 0.0
        %364 = vmatpush1.msra.mxu0 0.0
        %365 = vmatprep.subr.mxu0 0.0
        %366 = vmatpush1.msra.mxu0 0.0
        %367 = vmatprep.subr.mxu0 0.0
        %368 = vmatpush1.msra.mxu0 0.0
        %369 = vmatprep.subr.mxu0 0.0
        %370 = vmatpush1.msra.mxu0 0.0
        %371 = vmatprep.subr.mxu0 0.0
        %372 = vmatpush1.msra.mxu0 0.0
        %373 = vmatprep.subr.mxu0 0.0
        %374 = vmatpush1.msra.mxu0 0.0
        %375 = vmatprep.subr.mxu0 0.0
        %376 = vmatpush1.msra.mxu0 0.0
        %377 = vmatprep.subr.mxu0 0.0
        %378 = vmatpush1.msra.mxu0 0.0
        %379 = vmatprep.subr.mxu0 0.0
        %380 = vmatpush1.msra.mxu0 0.0
        %381 = vmatprep.subr.mxu0 0.0
        %382 = vmatpush1.msra.mxu0 0.0
        %383 = vmatprep.subr.mxu0 0.0
        %384 = vmatpush1.msra.mxu0 0.0
        %385 = vmatprep.subr.mxu0 0.0
        %386 = vmatpush1.msra.mxu0 0.0
        %387 = vmatprep.subr.mxu0 0.0
        %388 = vmatpush1.msra.mxu0 0.0
        %389 = vmatprep.subr.mxu0 0.0
        %390 = vmatpush1.msra.mxu0 0.0
        %391 = vmatprep.subr.mxu0 0.0
        %392 = vmatpush1.msra.mxu0 0.0
        %393 = vmatprep.subr.mxu0 0.0
        %394 = vmatpush1.msra.mxu0 0.0
        %395 = vmatprep.subr.mxu0 0.0
        %396 = vmatpush1.msra.mxu0 0.0
        %397 = vmatprep.subr.mxu0 0.0
        %398 = vmatpush1.msra.mxu0 0.0
        %399 = vmatprep.subr.mxu0 0.0
        %400 = vmatpush1.msra.mxu0 0.0
        %401 = vmatprep.subr.mxu0 0.0
        %402 = vmatpush1.msra.mxu0 0.0
        %403 = vmatprep.subr.mxu0 0.0
        %404 = vmatpush1.msra.mxu0 0.0
        %405 = vmatprep.subr.mxu0 0.0
        %406 = vmatpush1.msra.mxu0 0.0
        %407 = vmatprep.subr.mxu0 0.0
        %408 = vmatpush1.msra.mxu0 0.0
        %409 = vmatprep.mubr.f32.mxu0 0.0
        %410 = vmatmul.mubr.f32.gmra.mrb[0].mxu0 %v343
        %v411 = vpop.f32.mrb[0].mxu0
        %v412 = vadd.f32 %v339, %v411
        %v413 = vpop.f32.mrb[0].mxu0
        %v414 = vadd.f32 %v339, %v413
        %415 = vdwg.mxu0
        %v416 = vld [vmem:[%s3] sm:$0xf]
        %v417 = vld [vmem:[%s4] sm:$0xf]
        %419 = vset.pattern.permute.xlu0 0
        %420 = vperm.xlu0 %419, %v417
        %v421 = vpop.permute.xlu0 %420
        %v424 = vsel %vm341, %v416, 0
        %426 = vmatprep.subr.mxu0 %v327
        %427 = vmatpush1.msra.mxu0 %v326
        %428 = vmatprep.subr.mxu0 %v329
        %429 = vmatpush1.msra.mxu0 %v328
        %430 = vmatprep.subr.mxu0 %v331
        %431 = vmatpush1.msra.mxu0 %v330
        %432 = vmatprep.subr.mxu0 %v333
        %433 = vmatpush1.msra.mxu0 %v332
        %434 = vmatprep.subr.mxu0 0.0
        %435 = vmatpush1.msra.mxu0 0.0
        %436 = vmatprep.subr.mxu0 0.0
        %437 = vmatpush1.msra.mxu0 0.0
        %438 = vmatprep.subr.mxu0 0.0
        %439 = vmatpush1.msra.mxu0 0.0
        %440 = vmatprep.subr.mxu0 0.0
        %441 = vmatpush1.msra.mxu0 0.0
        %442 = vmatprep.subr.mxu0 0.0
        %443 = vmatpush1.msra.mxu0 0.0
        %444 = vmatprep.subr.mxu0 0.0
        %445 = vmatpush1.msra.mxu0 0.0
        %446 = vmatprep.subr.mxu0 0.0
        %447 = vmatpush1.msra.mxu0 0.0
        %448 = vmatprep.subr.mxu0 0.0
        %449 = vmatpush1.msra.mxu0 0.0
        %450 = vmatprep.subr.mxu0 0.0
        %451 = vmatpush1.msra.mxu0 0.0
        %452 = vmatprep.subr.mxu0 0.0
        %453 = vmatpush1.msra.mxu0 0.0
        %454 = vmatprep.subr.mxu0 0.0
        %455 = vmatpush1.msra.mxu0 0.0
        %456 = vmatprep.subr.mxu0 0.0
        %457 = vmatpush1.msra.mxu0 0.0
        %458 = vmatprep.subr.mxu0 0.0
        %459 = vmatpush1.msra.mxu0 0.0
        %460 = vmatprep.subr.mxu0 0.0
        %461 = vmatpush1.msra.mxu0 0.0
        %462 = vmatprep.subr.mxu0 0.0
        %463 = vmatpush1.msra.mxu0 0.0
        %464 = vmatprep.subr.mxu0 0.0
        %465 = vmatpush1.msra.mxu0 0.0
        %466 = vmatprep.subr.mxu0 0.0
        %467 = vmatpush1.msra.mxu0 0.0
        %468 = vmatprep.subr.mxu0 0.0
        %469 = vmatpush1.msra.mxu0 0.0
        %470 = vmatprep.subr.mxu0 0.0
        %471 = vmatpush1.msra.mxu0 0.0
        %472 = vmatprep.subr.mxu0 0.0
        %473 = vmatpush1.msra.mxu0 0.0
        %474 = vmatprep.subr.mxu0 0.0
        %475 = vmatpush1.msra.mxu0 0.0
        %476 = vmatprep.subr.mxu0 0.0
        %477 = vmatpush1.msra.mxu0 0.0
        %478 = vmatprep.subr.mxu0 0.0
        %479 = vmatpush1.msra.mxu0 0.0
        %480 = vmatprep.subr.mxu0 0.0
        %481 = vmatpush1.msra.mxu0 0.0
        %482 = vmatprep.subr.mxu0 0.0
        %483 = vmatpush1.msra.mxu0 0.0
        %484 = vmatprep.subr.mxu0 0.0
        %485 = vmatpush1.msra.mxu0 0.0
        %486 = vmatprep.subr.mxu0 0.0
        %487 = vmatpush1.msra.mxu0 0.0
        %488 = vmatprep.subr.mxu0 0.0
        %489 = vmatpush1.msra.mxu0 0.0
        %490 = vmatprep.mubr.f32.mxu0 0.0
        %491 = vmatmul.mubr.f32.gmra.mrb[0].mxu0 %v424
        %v492 = vpop.f32.mrb[0].mxu0
        %v493 = vadd.f32 %v421, %v492
        %v494 = vpop.f32.mrb[0].mxu0
        %v495 = vadd.f32 %v421, %v494
        %496 = vdwg.mxu0
        %v497 = vld [vmem:[%s5] sm:$0xff]
        %v498 = vld [vmem:[%s5 + $0x8] sm:$0xff]
        %v499 = vld [vmem:[%s5 + $0x10] sm:$0xff]
        %v500 = vld [vmem:[%s5 + $0x18] sm:$0xff]
        %v501 = vld [vmem:[%s6] sm:$0xff]
        %v502 = vld [vmem:[%s6 + $0x8] sm:$0xff]
        %v503 = vld [vmem:[%s6 + $0x10] sm:$0xff]
        %v504 = vld [vmem:[%s6 + $0x18] sm:$0xff]
        %506 = vset.pattern.permute.xlu0 0
        %507 = vperm.xlu0 %506, %v501
        %v508 = vpop.permute.xlu0 %507
        %511 = vset.pattern.permute.xlu0 0
        %512 = vperm.xlu0 %511, %v502
        %v513 = vpop.permute.xlu0 %512
        %516 = vset.pattern.permute.xlu0 0
        %517 = vperm.xlu0 %516, %v503
        %v518 = vpop.permute.xlu0 %517
        %521 = vset.pattern.permute.xlu0 0
        %522 = vperm.xlu0 %521, %v504
        %v523 = vpop.permute.xlu0 %522
        %v526 = vsel %vm341, %v497, 0
        %v529 = vsel %vm341, %v498, 0
        %v532 = vsel %vm341, %v499, 0
        %v535 = vsel %vm341, %v500, 0
        %537 = vmatprep.subr.mxu0 %v327
        %538 = vmatpush1.msra.mxu0 %v326
        %539 = vmatprep.subr.mxu0 %v329
        %540 = vmatpush1.msra.mxu0 %v328
        %541 = vmatprep.subr.mxu0 %v331
        %542 = vmatpush1.msra.mxu0 %v330
        %543 = vmatprep.subr.mxu0 %v333
        %544 = vmatpush1.msra.mxu0 %v332
        %545 = vmatprep.subr.mxu0 0.0
        %546 = vmatpush1.msra.mxu0 0.0
        %547 = vmatprep.subr.mxu0 0.0
        %548 = vmatpush1.msra.mxu0 0.0
        %549 = vmatprep.subr.mxu0 0.0
        %550 = vmatpush1.msra.mxu0 0.0
        %551 = vmatprep.subr.mxu0 0.0
        %552 = vmatpush1.msra.mxu0 0.0
        %553 = vmatprep.subr.mxu0 0.0
        %554 = vmatpush1.msra.mxu0 0.0
        %555 = vmatprep.subr.mxu0 0.0
        %556 = vmatpush1.msra.mxu0 0.0
        %557 = vmatprep.subr.mxu0 0.0
        %558 = vmatpush1.msra.mxu0 0.0
        %559 = vmatprep.subr.mxu0 0.0
        %560 = vmatpush1.msra.mxu0 0.0
        %561 = vmatprep.subr.mxu0 0.0
        %562 = vmatpush1.msra.mxu0 0.0
        %563 = vmatprep.subr.mxu0 0.0
        %564 = vmatpush1.msra.mxu0 0.0
        %565 = vmatprep.subr.mxu0 0.0
        %566 = vmatpush1.msra.mxu0 0.0
        %567 = vmatprep.subr.mxu0 0.0
        %568 = vmatpush1.msra.mxu0 0.0
        %569 = vmatprep.subr.mxu0 0.0
        %570 = vmatpush1.msra.mxu0 0.0
        %571 = vmatprep.subr.mxu0 0.0
        %572 = vmatpush1.msra.mxu0 0.0
        %573 = vmatprep.subr.mxu0 0.0
        %574 = vmatpush1.msra.mxu0 0.0
        %575 = vmatprep.subr.mxu0 0.0
        %576 = vmatpush1.msra.mxu0 0.0
        %577 = vmatprep.subr.mxu0 0.0
        %578 = vmatpush1.msra.mxu0 0.0
        %579 = vmatprep.subr.mxu0 0.0
        %580 = vmatpush1.msra.mxu0 0.0
        %581 = vmatprep.subr.mxu0 0.0
        %582 = vmatpush1.msra.mxu0 0.0
        %583 = vmatprep.subr.mxu0 0.0
        %584 = vmatpush1.msra.mxu0 0.0
        %585 = vmatprep.subr.mxu0 0.0
        %586 = vmatpush1.msra.mxu0 0.0
        %587 = vmatprep.subr.mxu0 0.0
        %588 = vmatpush1.msra.mxu0 0.0
        %589 = vmatprep.subr.mxu0 0.0
        %590 = vmatpush1.msra.mxu0 0.0
        %591 = vmatprep.subr.mxu0 0.0
        %592 = vmatpush1.msra.mxu0 0.0
        %593 = vmatprep.subr.mxu0 0.0
        %594 = vmatpush1.msra.mxu0 0.0
        %595 = vmatprep.subr.mxu0 0.0
        %596 = vmatpush1.msra.mxu0 0.0
        %597 = vmatprep.subr.mxu0 0.0
        %598 = vmatpush1.msra.mxu0 0.0
        %599 = vmatprep.subr.mxu0 0.0
        %600 = vmatpush1.msra.mxu0 0.0
        %601 = vmatprep.mubr.f32.mxu0 0.0
        %602 = vmatmul.mubr.f32.gmra.mrb[0].mxu0 %v526
        %v603 = vpop.f32.mrb[0].mxu0
        %v604 = vadd.f32 %v508, %v603
        %v605 = vpop.f32.mrb[0].mxu0
        %v606 = vadd.f32 %v508, %v605
        %607 = vmatprep.mubr.f32.mxu0 0.0
        %608 = vmatmul.mubr.f32.gmra.mrb[0].mxu0 %v529
        %v609 = vpop.f32.mrb[0].mxu0
        %v610 = vadd.f32 %v513, %v609
        %v611 = vpop.f32.mrb[0].mxu0
        %v612 = vadd.f32 %v513, %v611
        %613 = vmatprep.mubr.f32.mxu0 0.0
        %614 = vmatmul.mubr.f32.gmra.mrb[0].mxu0 %v532
        %v615 = vpop.f32.mrb[0].mxu0
        %v616 = vadd.f32 %v518, %v615
        %v617 = vpop.f32.mrb[0].mxu0
        %v618 = vadd.f32 %v518, %v617
        %619 = vmatprep.mubr.f32.mxu0 0.0
        %620 = vmatmul.mubr.f32.gmra.mrb[0].mxu0 %v535
        %v621 = vpop.f32.mrb[0].mxu0
        %v622 = vadd.f32 %v523, %v621
        %v623 = vpop.f32.mrb[0].mxu0
        %v624 = vadd.f32 %v523, %v623
        %625 = vdwg.mxu0
        %626 = vxpose.xlu0.b32.start [1/16] %v412, 128
        %627 = vxpose.xlu0.b32.cont [2/16] 0.0, 128
        %628 = vxpose.xlu0.b32.cont [3/16] 0.0, 128
        %629 = vxpose.xlu0.b32.cont [4/16] 0.0, 128
        %630 = vxpose.xlu0.b32.cont [5/16] 0.0, 128
        %631 = vxpose.xlu0.b32.cont [6/16] 0.0, 128
        %632 = vxpose.xlu0.b32.cont [7/16] 0.0, 128
        %633 = vxpose.xlu0.b32.cont [8/16] 0.0, 128
        %634 = vxpose.xlu0.b32.cont [9/16] 0.0, 128
        %635 = vxpose.xlu0.b32.cont [10/16] 0.0, 128
        %636 = vxpose.xlu0.b32.cont [11/16] 0.0, 128
        %637 = vxpose.xlu0.b32.cont [12/16] 0.0, 128
        %638 = vxpose.xlu0.b32.cont [13/16] 0.0, 128
        %639 = vxpose.xlu0.b32.cont [14/16] 0.0, 128
        %640 = vxpose.xlu0.b32.cont [15/16] 0.0, 128
        %641 = vxpose.xlu0.b32.end [16/16] 0.0, 128
        %v642 = vpop.trf.xlu0
        %v643 = vpop.trf.xlu0
        %v644 = vpop.trf.xlu0
        %v645 = vpop.trf.xlu0
        %v646 = vpop.trf.xlu0
        %v647 = vpop.trf.xlu0
        %v648 = vpop.trf.xlu0
        %v649 = vpop.trf.xlu0
        %v650 = vpop.trf.xlu0
        %v651 = vpop.trf.xlu0
        %v652 = vpop.trf.xlu0
        %v653 = vpop.trf.xlu0
        %v654 = vpop.trf.xlu0
        %v655 = vpop.trf.xlu0
        %v656 = vpop.trf.xlu0
        %v657 = vpop.trf.xlu0
        %658 = vxpose.xlu0.b32.start [1/16] %v414, 128
        %659 = vxpose.xlu0.b32.cont [2/16] 0.0, 128
        %660 = vxpose.xlu0.b32.cont [3/16] 0.0, 128
        %661 = vxpose.xlu0.b32.cont [4/16] 0.0, 128
        %662 = vxpose.xlu0.b32.cont [5/16] 0.0, 128
        %663 = vxpose.xlu0.b32.cont [6/16] 0.0, 128
        %664 = vxpose.xlu0.b32.cont [7/16] 0.0, 128
        %665 = vxpose.xlu0.b32.cont [8/16] 0.0, 128
        %666 = vxpose.xlu0.b32.cont [9/16] 0.0, 128
        %667 = vxpose.xlu0.b32.cont [10/16] 0.0, 128
        %668 = vxpose.xlu0.b32.cont [11/16] 0.0, 128
        %669 = vxpose.xlu0.b32.cont [12/16] 0.0, 128
        %670 = vxpose.xlu0.b32.cont [13/16] 0.0, 128
        %671 = vxpose.xlu0.b32.cont [14/16] 0.0, 128
        %672 = vxpose.xlu0.b32.cont [15/16] 0.0, 128
        %673 = vxpose.xlu0.b32.end [16/16] 0.0, 128
        %v674 = vpop.trf.xlu0
        %v675 = vpop.trf.xlu0
        %v676 = vpop.trf.xlu0
        %v677 = vpop.trf.xlu0
        %v678 = vpop.trf.xlu0
        %v679 = vpop.trf.xlu0
        %v680 = vpop.trf.xlu0
        %v681 = vpop.trf.xlu0
        %v682 = vpop.trf.xlu0
        %v683 = vpop.trf.xlu0
        %v684 = vpop.trf.xlu0
        %v685 = vpop.trf.xlu0
        %v686 = vpop.trf.xlu0
        %v687 = vpop.trf.xlu0
        %v688 = vpop.trf.xlu0
        %v689 = vpop.trf.xlu0
        %vm690 = vcmask 31744
        %v692 = vsel %vm690, %v642, 0
        %v695 = vsel %vm690, %v643, 0
        %v698 = vsel %vm690, %v644, 0
        %v701 = vsel %vm690, %v645, 0
        %v704 = vsel %vm690, %v646, 0
        %v707 = vsel %vm690, %v647, 0
        %v710 = vsel %vm690, %v648, 0
        %v713 = vsel %vm690, %v649, 0
        %v716 = vsel %vm690, %v650, 0
        %v719 = vsel %vm690, %v651, 0
        %v722 = vsel %vm690, %v652, 0
        %v725 = vsel %vm690, %v653, 0
        %v728 = vsel %vm690, %v654, 0
        %v731 = vsel %vm690, %v655, 0
        %v734 = vsel %vm690, %v656, 0
        %v737 = vsel %vm690, %v657, 0
        %v740 = vsel %vm690, %v674, 0
        %v743 = vsel %vm690, %v675, 0
        %v746 = vsel %vm690, %v676, 0
        %v749 = vsel %vm690, %v677, 0
        %v752 = vsel %vm690, %v678, 0
        %v755 = vsel %vm690, %v679, 0
        %v758 = vsel %vm690, %v680, 0
        %v761 = vsel %vm690, %v681, 0
        %v764 = vsel %vm690, %v682, 0
        %v767 = vsel %vm690, %v683, 0
        %v770 = vsel %vm690, %v684, 0
        %v773 = vsel %vm690, %v685, 0
        %v776 = vsel %vm690, %v686, 0
        %v779 = vsel %vm690, %v687, 0
        %v782 = vsel %vm690, %v688, 0
        %v785 = vsel %vm690, %v689, 0
        %vm787 = vcmask 1043456
        %v789 = vsel %vm787, %v493, 0
        %v792 = vsel %vm787, %v495, 0
        %794 = vmatprep.subr.mxu0 %v792
        %795 = vmatpush1.msra.mxu0 %v789
        %796 = vmatprep.subr.mxu0 0.0
        %797 = vmatpush1.msra.mxu0 0.0
        %798 = vmatprep.subr.mxu0 0.0
        %799 = vmatpush1.msra.mxu0 0.0
        %800 = vmatprep.subr.mxu0 0.0
        %801 = vmatpush1.msra.mxu0 0.0
        %802 = vmatprep.subr.mxu0 0.0
        %803 = vmatpush1.msra.mxu0 0.0
        %804 = vmatprep.subr.mxu0 0.0
        %805 = vmatpush1.msra.mxu0 0.0
        %806 = vmatprep.subr.mxu0 0.0
        %807 = vmatpush1.msra.mxu0 0.0
        %808 = vmatprep.subr.mxu0 0.0
        %809 = vmatpush1.msra.mxu0 0.0
        %810 = vmatprep.subr.mxu0 0.0
        %811 = vmatpush1.msra.mxu0 0.0
        %812 = vmatprep.subr.mxu0 0.0
        %813 = vmatpush1.msra.mxu0 0.0
        %814 = vmatprep.subr.mxu0 0.0
        %815 = vmatpush1.msra.mxu0 0.0
        %816 = vmatprep.subr.mxu0 0.0
        %817 = vmatpush1.msra.mxu0 0.0
        %818 = vmatprep.subr.mxu0 0.0
        %819 = vmatpush1.msra.mxu0 0.0
        %820 = vmatprep.subr.mxu0 0.0
        %821 = vmatpush1.msra.mxu0 0.0
        %822 = vmatprep.subr.mxu0 0.0
        %823 = vmatpush1.msra.mxu0 0.0
        %824 = vmatprep.subr.mxu0 0.0
        %825 = vmatpush1.msra.mxu0 0.0
        %826 = vmatprep.subr.mxu0 0.0
        %827 = vmatpush1.msra.mxu0 0.0
        %828 = vmatprep.subr.mxu0 0.0
        %829 = vmatpush1.msra.mxu0 0.0
        %830 = vmatprep.subr.mxu0 0.0
        %831 = vmatpush1.msra.mxu0 0.0
        %832 = vmatprep.subr.mxu0 0.0
        %833 = vmatpush1.msra.mxu0 0.0
        %834 = vmatprep.subr.mxu0 0.0
        %835 = vmatpush1.msra.mxu0 0.0
        %836 = vmatprep.subr.mxu0 0.0
        %837 = vmatpush1.msra.mxu0 0.0
        %838 = vmatprep.subr.mxu0 0.0
        %839 = vmatpush1.msra.mxu0 0.0
        %840 = vmatprep.subr.mxu0 0.0
        %841 = vmatpush1.msra.mxu0 0.0
        %842 = vmatprep.subr.mxu0 0.0
        %843 = vmatpush1.msra.mxu0 0.0
        %844 = vmatprep.subr.mxu0 0.0
        %845 = vmatpush1.msra.mxu0 0.0
        %846 = vmatprep.subr.mxu0 0.0
        %847 = vmatpush1.msra.mxu0 0.0
        %848 = vmatprep.subr.mxu0 0.0
        %849 = vmatpush1.msra.mxu0 0.0
        %850 = vmatprep.subr.mxu0 0.0
        %851 = vmatpush1.msra.mxu0 0.0
        %852 = vmatprep.subr.mxu0 0.0
        %853 = vmatpush1.msra.mxu0 0.0
        %854 = vmatprep.subr.mxu0 0.0
        %855 = vmatpush1.msra.mxu0 0.0
        %856 = vmatprep.subr.mxu0 0.0
        %857 = vmatpush1.msra.mxu0 0.0
        %858 = vmatprep.mubr.f32.mxu0 0.0
        %859 = vmatmul.mubr.f32.gmra.mrb[0].mxu0 %v692
        %v860 = vpop.f32.mrb[0].mxu0
        %v861 = vadd.f32 0.0, %v860
        %v862 = vpop.f32.mrb[0].mxu0
        %v863 = vadd.f32 0.0, %v862
        %864 = vmatprep.mubr.f32.mxu0 0.0
        %865 = vmatmul.mubr.f32.gmra.mrb[0].mxu0 %v695
        %v866 = vpop.f32.mrb[0].mxu0
        %v867 = vadd.f32 0.0, %v866
        %v868 = vpop.f32.mrb[0].mxu0
        %v869 = vadd.f32 0.0, %v868
        %870 = vmatprep.mubr.f32.mxu0 0.0
        %871 = vmatmul.mubr.f32.gmra.mrb[0].mxu0 %v698
        %v872 = vpop.f32.mrb[0].mxu0
        %v873 = vadd.f32 0.0, %v872
        %v874 = vpop.f32.mrb[0].mxu0
        %v875 = vadd.f32 0.0, %v874
        %876 = vmatprep.mubr.f32.mxu0 0.0
        %877 = vmatmul.mubr.f32.gmra.mrb[0].mxu0 %v701
        %v878 = vpop.f32.mrb[0].mxu0
        %v879 = vadd.f32 0.0, %v878
        %v880 = vpop.f32.mrb[0].mxu0
        %v881 = vadd.f32 0.0, %v880
        %882 = vmatprep.mubr.f32.mxu0 0.0
        %883 = vmatmul.mubr.f32.gmra.mrb[0].mxu0 %v704
        %v884 = vpop.f32.mrb[0].mxu0
        %v885 = vadd.f32 0.0, %v884
        %v886 = vpop.f32.mrb[0].mxu0
        %v887 = vadd.f32 0.0, %v886
        %888 = vmatprep.mubr.f32.mxu0 0.0
        %889 = vmatmul.mubr.f32.gmra.mrb[0].mxu0 %v707
        %v890 = vpop.f32.mrb[0].mxu0
        %v891 = vadd.f32 0.0, %v890
        %v892 = vpop.f32.mrb[0].mxu0
        %v893 = vadd.f32 0.0, %v892
        %894 = vmatprep.mubr.f32.mxu0 0.0
        %895 = vmatmul.mubr.f32.gmra.mrb[0].mxu0 %v710
        %v896 = vpop.f32.mrb[0].mxu0
        %v897 = vadd.f32 0.0, %v896
        %v898 = vpop.f32.mrb[0].mxu0
        %v899 = vadd.f32 0.0, %v898
        %900 = vmatprep.mubr.f32.mxu0 0.0
        %901 = vmatmul.mubr.f32.gmra.mrb[0].mxu0 %v713
        %v902 = vpop.f32.mrb[0].mxu0
        %v903 = vadd.f32 0.0, %v902
        %v904 = vpop.f32.mrb[0].mxu0
        %v905 = vadd.f32 0.0, %v904
        %906 = vmatprep.mubr.f32.mxu0 0.0
        %907 = vmatmul.mubr.f32.gmra.mrb[0].mxu0 %v716
        %v908 = vpop.f32.mrb[0].mxu0
        %v909 = vadd.f32 0.0, %v908
        %v910 = vpop.f32.mrb[0].mxu0
        %v911 = vadd.f32 0.0, %v910
        %912 = vmatprep.mubr.f32.mxu0 0.0
        %913 = vmatmul.mubr.f32.gmra.mrb[0].mxu0 %v719
        %v914 = vpop.f32.mrb[0].mxu0
        %v915 = vadd.f32 0.0, %v914
        %v916 = vpop.f32.mrb[0].mxu0
        %v917 = vadd.f32 0.0, %v916
        %918 = vmatprep.mubr.f32.mxu0 0.0
        %919 = vmatmul.mubr.f32.gmra.mrb[0].mxu0 %v722
        %v920 = vpop.f32.mrb[0].mxu0
        %v921 = vadd.f32 0.0, %v920
        %v922 = vpop.f32.mrb[0].mxu0
        %v923 = vadd.f32 0.0, %v922
        %924 = vmatprep.mubr.f32.mxu0 0.0
        %925 = vmatmul.mubr.f32.gmra.mrb[0].mxu0 %v725
        %v926 = vpop.f32.mrb[0].mxu0
        %v927 = vadd.f32 0.0, %v926
        %v928 = vpop.f32.mrb[0].mxu0
        %v929 = vadd.f32 0.0, %v928
        %930 = vmatprep.mubr.f32.mxu0 0.0
        %931 = vmatmul.mubr.f32.gmra.mrb[0].mxu0 %v728
        %v932 = vpop.f32.mrb[0].mxu0
        %v933 = vadd.f32 0.0, %v932
        %v934 = vpop.f32.mrb[0].mxu0
        %v935 = vadd.f32 0.0, %v934
        %936 = vmatprep.mubr.f32.mxu0 0.0
        %937 = vmatmul.mubr.f32.gmra.mrb[0].mxu0 %v731
        %v938 = vpop.f32.mrb[0].mxu0
        %v939 = vadd.f32 0.0, %v938
        %v940 = vpop.f32.mrb[0].mxu0
        %v941 = vadd.f32 0.0, %v940
        %942 = vmatprep.mubr.f32.mxu0 0.0
        %943 = vmatmul.mubr.f32.gmra.mrb[0].mxu0 %v734
        %v944 = vpop.f32.mrb[0].mxu0
        %v945 = vadd.f32 0.0, %v944
        %v946 = vpop.f32.mrb[0].mxu0
        %v947 = vadd.f32 0.0, %v946
        %948 = vmatprep.mubr.f32.mxu0 0.0
        %949 = vmatmul.mubr.f32.gmra.mrb[0].mxu0 %v737
        %v950 = vpop.f32.mrb[0].mxu0
        %v951 = vadd.f32 0.0, %v950
        %v952 = vpop.f32.mrb[0].mxu0
        %v953 = vadd.f32 0.0, %v952
        %954 = vmatprep.mubr.f32.mxu0 0.0
        %955 = vmatmul.mubr.f32.gmra.mrb[0].mxu0 %v740
        %v956 = vpop.f32.mrb[0].mxu0
        %v957 = vadd.f32 0.0, %v956
        %v958 = vpop.f32.mrb[0].mxu0
        %v959 = vadd.f32 0.0, %v958
        %960 = vmatprep.mubr.f32.mxu0 0.0
        %961 = vmatmul.mubr.f32.gmra.mrb[0].mxu0 %v743
        %v962 = vpop.f32.mrb[0].mxu0
        %v963 = vadd.f32 0.0, %v962
        %v964 = vpop.f32.mrb[0].mxu0
        %v965 = vadd.f32 0.0, %v964
        %966 = vmatprep.mubr.f32.mxu0 0.0
        %967 = vmatmul.mubr.f32.gmra.mrb[0].mxu0 %v746
        %v968 = vpop.f32.mrb[0].mxu0
        %v969 = vadd.f32 0.0, %v968
        %v970 = vpop.f32.mrb[0].mxu0
        %v971 = vadd.f32 0.0, %v970
        %972 = vmatprep.mubr.f32.mxu0 0.0
        %973 = vmatmul.mubr.f32.gmra.mrb[0].mxu0 %v749
        %v974 = vpop.f32.mrb[0].mxu0
        %v975 = vadd.f32 0.0, %v974
        %v976 = vpop.f32.mrb[0].mxu0
        %v977 = vadd.f32 0.0, %v976
        %978 = vmatprep.mubr.f32.mxu0 0.0
        %979 = vmatmul.mubr.f32.gmra.mrb[0].mxu0 %v752
        %v980 = vpop.f32.mrb[0].mxu0
        %v981 = vadd.f32 0.0, %v980
        %v982 = vpop.f32.mrb[0].mxu0
        %v983 = vadd.f32 0.0, %v982
        %984 = vmatprep.mubr.f32.mxu0 0.0
        %985 = vmatmul.mubr.f32.gmra.mrb[0].mxu0 %v755
        %v986 = vpop.f32.mrb[0].mxu0
        %v987 = vadd.f32 0.0, %v986
        %v988 = vpop.f32.mrb[0].mxu0
        %v989 = vadd.f32 0.0, %v988
        %990 = vmatprep.mubr.f32.mxu0 0.0
        %991 = vmatmul.mubr.f32.gmra.mrb[0].mxu0 %v758
        %v992 = vpop.f32.mrb[0].mxu0
        %v993 = vadd.f32 0.0, %v992
        %v994 = vpop.f32.mrb[0].mxu0
        %v995 = vadd.f32 0.0, %v994
        %996 = vmatprep.mubr.f32.mxu0 0.0
        %997 = vmatmul.mubr.f32.gmra.mrb[0].mxu0 %v761
        %v998 = vpop.f32.mrb[0].mxu0
        %v999 = vadd.f32 0.0, %v998
        %v1000 = vpop.f32.mrb[0].mxu0
        %v1001 = vadd.f32 0.0, %v1000
        %1002 = vmatprep.mubr.f32.mxu0 0.0
        %1003 = vmatmul.mubr.f32.gmra.mrb[0].mxu0 %v764
        %v1004 = vpop.f32.mrb[0].mxu0
        %v1005 = vadd.f32 0.0, %v1004
        %v1006 = vpop.f32.mrb[0].mxu0
        %v1007 = vadd.f32 0.0, %v1006
        %1008 = vmatprep.mubr.f32.mxu0 0.0
        %1009 = vmatmul.mubr.f32.gmra.mrb[0].mxu0 %v767
        %v1010 = vpop.f32.mrb[0].mxu0
        %v1011 = vadd.f32 0.0, %v1010
        %v1012 = vpop.f32.mrb[0].mxu0
        %v1013 = vadd.f32 0.0, %v1012
        %1014 = vmatprep.mubr.f32.mxu0 0.0
        %1015 = vmatmul.mubr.f32.gmra.mrb[0].mxu0 %v770
        %v1016 = vpop.f32.mrb[0].mxu0
        %v1017 = vadd.f32 0.0, %v1016
        %v1018 = vpop.f32.mrb[0].mxu0
        %v1019 = vadd.f32 0.0, %v1018
        %1020 = vmatprep.mubr.f32.mxu0 0.0
        %1021 = vmatmul.mubr.f32.gmra.mrb[0].mxu0 %v773
        %v1022 = vpop.f32.mrb[0].mxu0
        %v1023 = vadd.f32 0.0, %v1022
        %v1024 = vpop.f32.mrb[0].mxu0
        %v1025 = vadd.f32 0.0, %v1024
        %1026 = vmatprep.mubr.f32.mxu0 0.0
        %1027 = vmatmul.mubr.f32.gmra.mrb[0].mxu0 %v776
        %v1028 = vpop.f32.mrb[0].mxu0
        %v1029 = vadd.f32 0.0, %v1028
        %v1030 = vpop.f32.mrb[0].mxu0
        %v1031 = vadd.f32 0.0, %v1030
        %1032 = vmatprep.mubr.f32.mxu0 0.0
        %1033 = vmatmul.mubr.f32.gmra.mrb[0].mxu0 %v779
        %v1034 = vpop.f32.mrb[0].mxu0
        %v1035 = vadd.f32 0.0, %v1034
        %v1036 = vpop.f32.mrb[0].mxu0
        %v1037 = vadd.f32 0.0, %v1036
        %1038 = vmatprep.mubr.f32.mxu0 0.0
        %1039 = vmatmul.mubr.f32.gmra.mrb[0].mxu0 %v782
        %v1040 = vpop.f32.mrb[0].mxu0
        %v1041 = vadd.f32 0.0, %v1040
        %v1042 = vpop.f32.mrb[0].mxu0
        %v1043 = vadd.f32 0.0, %v1042
        %1044 = vmatprep.mubr.f32.mxu0 0.0
        %1045 = vmatmul.mubr.f32.gmra.mrb[0].mxu0 %v785
        %v1046 = vpop.f32.mrb[0].mxu0
        %v1047 = vadd.f32 0.0, %v1046
        %v1048 = vpop.f32.mrb[0].mxu0
        %v1049 = vadd.f32 0.0, %v1048
        %1050 = vdwg.mxu0
        %v1051 = vmax.f32 %v861, %v863
        %1052 = vmax.xlane.f32.xlu0 %v1051
        %v1053 = vpop.xlane.xlu0 %1052
        %v1054 = vmax.f32 %v867, %v869
        %1055 = vmax.xlane.f32.xlu0 %v1054
        %v1056 = vpop.xlane.xlu0 %1055
        %v1057 = vmax.f32 %v873, %v875
        %1058 = vmax.xlane.f32.xlu0 %v1057
        %v1059 = vpop.xlane.xlu0 %1058
        %v1060 = vmax.f32 %v879, %v881
        %1061 = vmax.xlane.f32.xlu0 %v1060
        %v1062 = vpop.xlane.xlu0 %1061
        %v1063 = vmax.f32 %v885, %v887
        %1064 = vmax.xlane.f32.xlu0 %v1063
        %v1065 = vpop.xlane.xlu0 %1064
        %v1066 = vmax.f32 %v891, %v893
        %1067 = vmax.xlane.f32.xlu0 %v1066
        %v1068 = vpop.xlane.xlu0 %1067
        %v1069 = vmax.f32 %v897, %v899
        %1070 = vmax.xlane.f32.xlu0 %v1069
        %v1071 = vpop.xlane.xlu0 %1070
        %v1072 = vmax.f32 %v903, %v905
        %1073 = vmax.xlane.f32.xlu0 %v1072
        %v1074 = vpop.xlane.xlu0 %1073
        %v1075 = vmax.f32 %v909, %v911
        %1076 = vmax.xlane.f32.xlu0 %v1075
        %v1077 = vpop.xlane.xlu0 %1076
        %v1078 = vmax.f32 %v915, %v917
        %1079 = vmax.xlane.f32.xlu0 %v1078
        %v1080 = vpop.xlane.xlu0 %1079
        %v1081 = vmax.f32 %v921, %v923
        %1082 = vmax.xlane.f32.xlu0 %v1081
        %v1083 = vpop.xlane.xlu0 %1082
        %v1084 = vmax.f32 %v927, %v929
        %1085 = vmax.xlane.f32.xlu0 %v1084
        %v1086 = vpop.xlane.xlu0 %1085
        %v1087 = vmax.f32 %v933, %v935
        %1088 = vmax.xlane.f32.xlu0 %v1087
        %v1089 = vpop.xlane.xlu0 %1088
        %v1090 = vmax.f32 %v939, %v941
        %1091 = vmax.xlane.f32.xlu0 %v1090
        %v1092 = vpop.xlane.xlu0 %1091
        %v1093 = vmax.f32 %v945, %v947
        %1094 = vmax.xlane.f32.xlu0 %v1093
        %v1095 = vpop.xlane.xlu0 %1094
        %v1096 = vmax.f32 %v951, %v953
        %1097 = vmax.xlane.f32.xlu0 %v1096
        %v1098 = vpop.xlane.xlu0 %1097
        %v1099 = vmax.f32 %v957, %v959
        %1100 = vmax.xlane.f32.xlu0 %v1099
        %v1101 = vpop.xlane.xlu0 %1100
        %v1102 = vmax.f32 %v963, %v965
        %1103 = vmax.xlane.f32.xlu0 %v1102
        %v1104 = vpop.xlane.xlu0 %1103
        %v1105 = vmax.f32 %v969, %v971
        %1106 = vmax.xlane.f32.xlu0 %v1105
        %v1107 = vpop.xlane.xlu0 %1106
        %v1108 = vmax.f32 %v975, %v977
        %1109 = vmax.xlane.f32.xlu0 %v1108
        %v1110 = vpop.xlane.xlu0 %1109
        %v1111 = vmax.f32 %v981, %v983
        %1112 = vmax.xlane.f32.xlu0 %v1111
        %v1113 = vpop.xlane.xlu0 %1112
        %v1114 = vmax.f32 %v987, %v989
        %1115 = vmax.xlane.f32.xlu0 %v1114
        %v1116 = vpop.xlane.xlu0 %1115
        %v1117 = vmax.f32 %v993, %v995
        %1118 = vmax.xlane.f32.xlu0 %v1117
        %v1119 = vpop.xlane.xlu0 %1118
        %v1120 = vmax.f32 %v999, %v1001
        %1121 = vmax.xlane.f32.xlu0 %v1120
        %v1122 = vpop.xlane.xlu0 %1121
        %v1123 = vmax.f32 %v1005, %v1007
        %1124 = vmax.xlane.f32.xlu0 %v1123
        %v1125 = vpop.xlane.xlu0 %1124
        %v1126 = vmax.f32 %v1011, %v1013
        %1127 = vmax.xlane.f32.xlu0 %v1126
        %v1128 = vpop.xlane.xlu0 %1127
        %v1129 = vmax.f32 %v1017, %v1019
        %1130 = vmax.xlane.f32.xlu0 %v1129
        %v1131 = vpop.xlane.xlu0 %1130
        %v1132 = vmax.f32 %v1023, %v1025
        %1133 = vmax.xlane.f32.xlu0 %v1132
        %v1134 = vpop.xlane.xlu0 %1133
        %v1135 = vmax.f32 %v1029, %v1031
        %1136 = vmax.xlane.f32.xlu0 %v1135
        %v1137 = vpop.xlane.xlu0 %1136
        %v1138 = vmax.f32 %v1035, %v1037
        %1139 = vmax.xlane.f32.xlu0 %v1138
        %v1140 = vpop.xlane.xlu0 %1139
        %v1141 = vmax.f32 %v1041, %v1043
        %1142 = vmax.xlane.f32.xlu0 %v1141
        %v1143 = vpop.xlane.xlu0 %1142
        %v1144 = vmax.f32 %v1047, %v1049
        %1145 = vmax.xlane.f32.xlu0 %v1144
        %v1146 = vpop.xlane.xlu0 %1145
        %v1147 = vsub.f32 %v861, %v1053
        %v1148 = vsub.f32 %v863, %v1053
        %v1149 = vsub.f32 %v867, %v1056
        %v1150 = vsub.f32 %v869, %v1056
        %v1151 = vsub.f32 %v873, %v1059
        %v1152 = vsub.f32 %v875, %v1059
        %v1153 = vsub.f32 %v879, %v1062
        %v1154 = vsub.f32 %v881, %v1062
        %v1155 = vsub.f32 %v885, %v1065
        %v1156 = vsub.f32 %v887, %v1065
        %v1157 = vsub.f32 %v891, %v1068
        %v1158 = vsub.f32 %v893, %v1068
        %v1159 = vsub.f32 %v897, %v1071
        %v1160 = vsub.f32 %v899, %v1071
        %v1161 = vsub.f32 %v903, %v1074
        %v1162 = vsub.f32 %v905, %v1074
        %v1163 = vsub.f32 %v909, %v1077
        %v1164 = vsub.f32 %v911, %v1077
        %v1165 = vsub.f32 %v915, %v1080
        %v1166 = vsub.f32 %v917, %v1080
        %v1167 = vsub.f32 %v921, %v1083
        %v1168 = vsub.f32 %v923, %v1083
        %v1169 = vsub.f32 %v927, %v1086
        %v1170 = vsub.f32 %v929, %v1086
        %v1171 = vsub.f32 %v933, %v1089
        %v1172 = vsub.f32 %v935, %v1089
        %v1173 = vsub.f32 %v939, %v1092
        %v1174 = vsub.f32 %v941, %v1092
        %v1175 = vsub.f32 %v945, %v1095
        %v1176 = vsub.f32 %v947, %v1095
        %v1177 = vsub.f32 %v951, %v1098
        %v1178 = vsub.f32 %v953, %v1098
        %v1179 = vsub.f32 %v957, %v1101
        %v1180 = vsub.f32 %v959, %v1101
        %v1181 = vsub.f32 %v963, %v1104
        %v1182 = vsub.f32 %v965, %v1104
        %v1183 = vsub.f32 %v969, %v1107
        %v1184 = vsub.f32 %v971, %v1107
        %v1185 = vsub.f32 %v975, %v1110
        %v1186 = vsub.f32 %v977, %v1110
        %v1187 = vsub.f32 %v981, %v1113
        %v1188 = vsub.f32 %v983, %v1113
        %v1189 = vsub.f32 %v987, %v1116
        %v1190 = vsub.f32 %v989, %v1116
        %v1191 = vsub.f32 %v993, %v1119
        %v1192 = vsub.f32 %v995, %v1119
        %v1193 = vsub.f32 %v999, %v1122
        %v1194 = vsub.f32 %v1001, %v1122
        %v1195 = vsub.f32 %v1005, %v1125
        %v1196 = vsub.f32 %v1007, %v1125
        %v1197 = vsub.f32 %v1011, %v1128
        %v1198 = vsub.f32 %v1013, %v1128
        %v1199 = vsub.f32 %v1017, %v1131
        %v1200 = vsub.f32 %v1019, %v1131
        %v1201 = vsub.f32 %v1023, %v1134
        %v1202 = vsub.f32 %v1025, %v1134
        %v1203 = vsub.f32 %v1029, %v1137
        %v1204 = vsub.f32 %v1031, %v1137
        %v1205 = vsub.f32 %v1035, %v1140
        %v1206 = vsub.f32 %v1037, %v1140
        %v1207 = vsub.f32 %v1041, %v1143
        %v1208 = vsub.f32 %v1043, %v1143
        %v1209 = vsub.f32 %v1047, %v1146
        %v1210 = vsub.f32 %v1049, %v1146
        %v1211 = vmul.f32 %v1147, 1.442695
        %v1212 = vpow.pop %v1211
        %v1213 = vmul.f32 %v1148, 1.442695
        %v1214 = vpow.pop %v1213
        %v1215 = vmul.f32 %v1149, 1.442695
        %v1216 = vpow.pop %v1215
        %v1217 = vmul.f32 %v1150, 1.442695
        %v1218 = vpow.pop %v1217
        %v1219 = vmul.f32 %v1151, 1.442695
        %v1220 = vpow.pop %v1219
        %v1221 = vmul.f32 %v1152, 1.442695
        %v1222 = vpow.pop %v1221
        %v1223 = vmul.f32 %v1153, 1.442695
        %v1224 = vpow.pop %v1223
        %v1225 = vmul.f32 %v1154, 1.442695
        %v1226 = vpow.pop %v1225
        %v1227 = vmul.f32 %v1155, 1.442695
        %v1228 = vpow.pop %v1227
        %v1229 = vmul.f32 %v1156, 1.442695
        %v1230 = vpow.pop %v1229
        %v1231 = vmul.f32 %v1157, 1.442695
        %v1232 = vpow.pop %v1231
        %v1233 = vmul.f32 %v1158, 1.442695
        %v1234 = vpow.pop %v1233
        %v1235 = vmul.f32 %v1159, 1.442695
        %v1236 = vpow.pop %v1235
        %v1237 = vmul.f32 %v1160, 1.442695
        %v1238 = vpow.pop %v1237
        %v1239 = vmul.f32 %v1161, 1.442695
        %v1240 = vpow.pop %v1239
        %v1241 = vmul.f32 %v1162, 1.442695
        %v1242 = vpow.pop %v1241
        %v1243 = vmul.f32 %v1163, 1.442695
        %v1244 = vpow.pop %v1243
        %v1245 = vmul.f32 %v1164, 1.442695
        %v1246 = vpow.pop %v1245
        %v1247 = vmul.f32 %v1165, 1.442695
        %v1248 = vpow.pop %v1247
        %v1249 = vmul.f32 %v1166, 1.442695
        %v1250 = vpow.pop %v1249
        %v1251 = vmul.f32 %v1167, 1.442695
        %v1252 = vpow.pop %v1251
        %v1253 = vmul.f32 %v1168, 1.442695
        %v1254 = vpow.pop %v1253
        %v1255 = vmul.f32 %v1169, 1.442695
        %v1256 = vpow.pop %v1255
        %v1257 = vmul.f32 %v1170, 1.442695
        %v1258 = vpow.pop %v1257
        %v1259 = vmul.f32 %v1171, 1.442695
        %v1260 = vpow.pop %v1259
        %v1261 = vmul.f32 %v1172, 1.442695
        %v1262 = vpow.pop %v1261
        %v1263 = vmul.f32 %v1173, 1.442695
        %v1264 = vpow.pop %v1263
        %v1265 = vmul.f32 %v1174, 1.442695
        %v1266 = vpow.pop %v1265
        %v1267 = vmul.f32 %v1175, 1.442695
        %v1268 = vpow.pop %v1267
        %v1269 = vmul.f32 %v1176, 1.442695
        %v1270 = vpow.pop %v1269
        %v1271 = vmul.f32 %v1177, 1.442695
        %v1272 = vpow.pop %v1271
        %v1273 = vmul.f32 %v1178, 1.442695
        %v1274 = vpow.pop %v1273
        %v1275 = vmul.f32 %v1179, 1.442695
        %v1276 = vpow.pop %v1275
        %v1277 = vmul.f32 %v1180, 1.442695
        %v1278 = vpow.pop %v1277
        %v1279 = vmul.f32 %v1181, 1.442695
        %v1280 = vpow.pop %v1279
        %v1281 = vmul.f32 %v1182, 1.442695
        %v1282 = vpow.pop %v1281
        %v1283 = vmul.f32 %v1183, 1.442695
        %v1284 = vpow.pop %v1283
        %v1285 = vmul.f32 %v1184, 1.442695
        %v1286 = vpow.pop %v1285
        %v1287 = vmul.f32 %v1185, 1.442695
        %v1288 = vpow.pop %v1287
        %v1289 = vmul.f32 %v1186, 1.442695
        %v1290 = vpow.pop %v1289
        %v1291 = vmul.f32 %v1187, 1.442695
        %v1292 = vpow.pop %v1291
        %v1293 = vmul.f32 %v1188, 1.442695
        %v1294 = vpow.pop %v1293
        %v1295 = vmul.f32 %v1189, 1.442695
        %v1296 = vpow.pop %v1295
        %v1297 = vmul.f32 %v1190, 1.442695
        %v1298 = vpow.pop %v1297
        %v1299 = vmul.f32 %v1191, 1.442695
        %v1300 = vpow.pop %v1299
        %v1301 = vmul.f32 %v1192, 1.442695
        %v1302 = vpow.pop %v1301
        %v1303 = vmul.f32 %v1193, 1.442695
        %v1304 = vpow.pop %v1303
        %v1305 = vmul.f32 %v1194, 1.442695
        %v1306 = vpow.pop %v1305
        %v1307 = vmul.f32 %v1195, 1.442695
        %v1308 = vpow.pop %v1307
        %v1309 = vmul.f32 %v1196, 1.442695
        %v1310 = vpow.pop %v1309
        %v1311 = vmul.f32 %v1197, 1.442695
        %v1312 = vpow.pop %v1311
        %v1313 = vmul.f32 %v1198, 1.442695
        %v1314 = vpow.pop %v1313
        %v1315 = vmul.f32 %v1199, 1.442695
        %v1316 = vpow.pop %v1315
        %v1317 = vmul.f32 %v1200, 1.442695
        %v1318 = vpow.pop %v1317
        %v1319 = vmul.f32 %v1201, 1.442695
        %v1320 = vpow.pop %v1319
        %v1321 = vmul.f32 %v1202, 1.442695
        %v1322 = vpow.pop %v1321
        %v1323 = vmul.f32 %v1203, 1.442695
        %v1324 = vpow.pop %v1323
        %v1325 = vmul.f32 %v1204, 1.442695
        %v1326 = vpow.pop %v1325
        %v1327 = vmul.f32 %v1205, 1.442695
        %v1328 = vpow.pop %v1327
        %v1329 = vmul.f32 %v1206, 1.442695
        %v1330 = vpow.pop %v1329
        %v1331 = vmul.f32 %v1207, 1.442695
        %v1332 = vpow.pop %v1331
        %v1333 = vmul.f32 %v1208, 1.442695
        %v1334 = vpow.pop %v1333
        %v1335 = vmul.f32 %v1209, 1.442695
        %v1336 = vpow.pop %v1335
        %v1337 = vmul.f32 %v1210, 1.442695
        %v1338 = vpow.pop %v1337
        %v1339 = vadd.f32 %v1212, %v1214
        %1340 = vadd.xlane.f32.xlu0 %v1339
        %v1341 = vpop.xlane.xlu0 %1340
        %v1342 = vadd.f32 %v1216, %v1218
        %1343 = vadd.xlane.f32.xlu0 %v1342
        %v1344 = vpop.xlane.xlu0 %1343
        %v1345 = vadd.f32 %v1220, %v1222
        %1346 = vadd.xlane.f32.xlu0 %v1345
        %v1347 = vpop.xlane.xlu0 %1346
        %v1348 = vadd.f32 %v1224, %v1226
        %1349 = vadd.xlane.f32.xlu0 %v1348
        %v1350 = vpop.xlane.xlu0 %1349
        %v1351 = vadd.f32 %v1228, %v1230
        %1352 = vadd.xlane.f32.xlu0 %v1351
        %v1353 = vpop.xlane.xlu0 %1352
        %v1354 = vadd.f32 %v1232, %v1234
        %1355 = vadd.xlane.f32.xlu0 %v1354
        %v1356 = vpop.xlane.xlu0 %1355
        %v1357 = vadd.f32 %v1236, %v1238
        %1358 = vadd.xlane.f32.xlu0 %v1357
        %v1359 = vpop.xlane.xlu0 %1358
        %v1360 = vadd.f32 %v1240, %v1242
        %1361 = vadd.xlane.f32.xlu0 %v1360
        %v1362 = vpop.xlane.xlu0 %1361
        %v1363 = vadd.f32 %v1244, %v1246
        %1364 = vadd.xlane.f32.xlu0 %v1363
        %v1365 = vpop.xlane.xlu0 %1364
        %v1366 = vadd.f32 %v1248, %v1250
        %1367 = vadd.xlane.f32.xlu0 %v1366
        %v1368 = vpop.xlane.xlu0 %1367
        %v1369 = vadd.f32 %v1252, %v1254
        %1370 = vadd.xlane.f32.xlu0 %v1369
        %v1371 = vpop.xlane.xlu0 %1370
        %v1372 = vadd.f32 %v1256, %v1258
        %1373 = vadd.xlane.f32.xlu0 %v1372
        %v1374 = vpop.xlane.xlu0 %1373
        %v1375 = vadd.f32 %v1260, %v1262
        %1376 = vadd.xlane.f32.xlu0 %v1375
        %v1377 = vpop.xlane.xlu0 %1376
        %v1378 = vadd.f32 %v1264, %v1266
        %1379 = vadd.xlane.f32.xlu0 %v1378
        %v1380 = vpop.xlane.xlu0 %1379
        %v1381 = vadd.f32 %v1268, %v1270
        %1382 = vadd.xlane.f32.xlu0 %v1381
        %v1383 = vpop.xlane.xlu0 %1382
        %v1384 = vadd.f32 %v1272, %v1274
        %1385 = vadd.xlane.f32.xlu0 %v1384
        %v1386 = vpop.xlane.xlu0 %1385
        %v1387 = vadd.f32 %v1276, %v1278
        %1388 = vadd.xlane.f32.xlu0 %v1387
        %v1389 = vpop.xlane.xlu0 %1388
        %v1390 = vadd.f32 %v1280, %v1282
        %1391 = vadd.xlane.f32.xlu0 %v1390
        %v1392 = vpop.xlane.xlu0 %1391
        %v1393 = vadd.f32 %v1284, %v1286
        %1394 = vadd.xlane.f32.xlu0 %v1393
        %v1395 = vpop.xlane.xlu0 %1394
        %v1396 = vadd.f32 %v1288, %v1290
        %1397 = vadd.xlane.f32.xlu0 %v1396
        %v1398 = vpop.xlane.xlu0 %1397
        %v1399 = vadd.f32 %v1292, %v1294
        %1400 = vadd.xlane.f32.xlu0 %v1399
        %v1401 = vpop.xlane.xlu0 %1400
        %v1402 = vadd.f32 %v1296, %v1298
        %1403 = vadd.xlane.f32.xlu0 %v1402
        %v1404 = vpop.xlane.xlu0 %1403
        %v1405 = vadd.f32 %v1300, %v1302
        %1406 = vadd.xlane.f32.xlu0 %v1405
        %v1407 = vpop.xlane.xlu0 %1406
        %v1408 = vadd.f32 %v1304, %v1306
        %1409 = vadd.xlane.f32.xlu0 %v1408
        %v1410 = vpop.xlane.xlu0 %1409
        %v1411 = vadd.f32 %v1308, %v1310
        %1412 = vadd.xlane.f32.xlu0 %v1411
        %v1413 = vpop.xlane.xlu0 %1412
        %v1414 = vadd.f32 %v1312, %v1314
        %1415 = vadd.xlane.f32.xlu0 %v1414
        %v1416 = vpop.xlane.xlu0 %1415
        %v1417 = vadd.f32 %v1316, %v1318
        %1418 = vadd.xlane.f32.xlu0 %v1417
        %v1419 = vpop.xlane.xlu0 %1418
        %v1420 = vadd.f32 %v1320, %v1322
        %1421 = vadd.xlane.f32.xlu0 %v1420
        %v1422 = vpop.xlane.xlu0 %1421
        %v1423 = vadd.f32 %v1324, %v1326
        %1424 = vadd.xlane.f32.xlu0 %v1423
        %v1425 = vpop.xlane.xlu0 %1424
        %v1426 = vadd.f32 %v1328, %v1330
        %1427 = vadd.xlane.f32.xlu0 %v1426
        %v1428 = vpop.xlane.xlu0 %1427
        %v1429 = vadd.f32 %v1332, %v1334
        %1430 = vadd.xlane.f32.xlu0 %v1429
        %v1431 = vpop.xlane.xlu0 %1430
        %v1432 = vadd.f32 %v1336, %v1338
        %1433 = vadd.xlane.f32.xlu0 %v1432
        %v1434 = vpop.xlane.xlu0 %1433
        %v1435 = vrcp.pop %v1341
        %v1436 = vmul.f32 %v1212, %v1435
        %v1437 = vmul.f32 %v1214, %v1435
        %v1438 = vrcp.pop %v1344
        %v1439 = vmul.f32 %v1216, %v1438
        %v1440 = vmul.f32 %v1218, %v1438
        %v1441 = vrcp.pop %v1347
        %v1442 = vmul.f32 %v1220, %v1441
        %v1443 = vmul.f32 %v1222, %v1441
        %v1444 = vrcp.pop %v1350
        %v1445 = vmul.f32 %v1224, %v1444
        %v1446 = vmul.f32 %v1226, %v1444
        %v1447 = vrcp.pop %v1353
        %v1448 = vmul.f32 %v1228, %v1447
        %v1449 = vmul.f32 %v1230, %v1447
        %v1450 = vrcp.pop %v1356
        %v1451 = vmul.f32 %v1232, %v1450
        %v1452 = vmul.f32 %v1234, %v1450
        %v1453 = vrcp.pop %v1359
        %v1454 = vmul.f32 %v1236, %v1453
        %v1455 = vmul.f32 %v1238, %v1453
        %v1456 = vrcp.pop %v1362
        %v1457 = vmul.f32 %v1240, %v1456
        %v1458 = vmul.f32 %v1242, %v1456
        %v1459 = vrcp.pop %v1365
        %v1460 = vmul.f32 %v1244, %v1459
        %v1461 = vmul.f32 %v1246, %v1459
        %v1462 = vrcp.pop %v1368
        %v1463 = vmul.f32 %v1248, %v1462
        %v1464 = vmul.f32 %v1250, %v1462
        %v1465 = vrcp.pop %v1371
        %v1466 = vmul.f32 %v1252, %v1465
        %v1467 = vmul.f32 %v1254, %v1465
        %v1468 = vrcp.pop %v1374
        %v1469 = vmul.f32 %v1256, %v1468
        %v1470 = vmul.f32 %v1258, %v1468
        %v1471 = vrcp.pop %v1377
        %v1472 = vmul.f32 %v1260, %v1471
        %v1473 = vmul.f32 %v1262, %v1471
        %v1474 = vrcp.pop %v1380
        %v1475 = vmul.f32 %v1264, %v1474
        %v1476 = vmul.f32 %v1266, %v1474
        %v1477 = vrcp.pop %v1383
        %v1478 = vmul.f32 %v1268, %v1477
        %v1479 = vmul.f32 %v1270, %v1477
        %v1480 = vrcp.pop %v1386
        %v1481 = vmul.f32 %v1272, %v1480
        %v1482 = vmul.f32 %v1274, %v1480
        %v1483 = vrcp.pop %v1389
        %v1484 = vmul.f32 %v1276, %v1483
        %v1485 = vmul.f32 %v1278, %v1483
        %v1486 = vrcp.pop %v1392
        %v1487 = vmul.f32 %v1280, %v1486
        %v1488 = vmul.f32 %v1282, %v1486
        %v1489 = vrcp.pop %v1395
        %v1490 = vmul.f32 %v1284, %v1489
        %v1491 = vmul.f32 %v1286, %v1489
        %v1492 = vrcp.pop %v1398
        %v1493 = vmul.f32 %v1288, %v1492
        %v1494 = vmul.f32 %v1290, %v1492
        %v1495 = vrcp.pop %v1401
        %v1496 = vmul.f32 %v1292, %v1495
        %v1497 = vmul.f32 %v1294, %v1495
        %v1498 = vrcp.pop %v1404
        %v1499 = vmul.f32 %v1296, %v1498
        %v1500 = vmul.f32 %v1298, %v1498
        %v1501 = vrcp.pop %v1407
        %v1502 = vmul.f32 %v1300, %v1501
        %v1503 = vmul.f32 %v1302, %v1501
        %v1504 = vrcp.pop %v1410
        %v1505 = vmul.f32 %v1304, %v1504
        %v1506 = vmul.f32 %v1306, %v1504
        %v1507 = vrcp.pop %v1413
        %v1508 = vmul.f32 %v1308, %v1507
        %v1509 = vmul.f32 %v1310, %v1507
        %v1510 = vrcp.pop %v1416
        %v1511 = vmul.f32 %v1312, %v1510
        %v1512 = vmul.f32 %v1314, %v1510
        %v1513 = vrcp.pop %v1419
        %v1514 = vmul.f32 %v1316, %v1513
        %v1515 = vmul.f32 %v1318, %v1513
        %v1516 = vrcp.pop %v1422
        %v1517 = vmul.f32 %v1320, %v1516
        %v1518 = vmul.f32 %v1322, %v1516
        %v1519 = vrcp.pop %v1425
        %v1520 = vmul.f32 %v1324, %v1519
        %v1521 = vmul.f32 %v1326, %v1519
        %v1522 = vrcp.pop %v1428
        %v1523 = vmul.f32 %v1328, %v1522
        %v1524 = vmul.f32 %v1330, %v1522
        %v1525 = vrcp.pop %v1431
        %v1526 = vmul.f32 %v1332, %v1525
        %v1527 = vmul.f32 %v1334, %v1525
        %v1528 = vrcp.pop %v1434
        %v1529 = vmul.f32 %v1336, %v1528
        %v1530 = vmul.f32 %v1338, %v1528
        %1531 = vmatprep.subr.mxu0 %v1437
        %1532 = vmatpush1.xpose.msra.mxu0 %v1436
        %1533 = vmatprep.subr.mxu0 %v1440
        %1534 = vmatpush1.xpose.msra.mxu0 %v1439
        %1535 = vmatprep.subr.mxu0 %v1443
        %1536 = vmatpush1.xpose.msra.mxu0 %v1442
        %1537 = vmatprep.subr.mxu0 %v1446
        %1538 = vmatpush1.xpose.msra.mxu0 %v1445
        %1539 = vmatprep.subr.mxu0 %v1449
        %1540 = vmatpush1.xpose.msra.mxu0 %v1448
        %1541 = vmatprep.subr.mxu0 %v1452
        %1542 = vmatpush1.xpose.msra.mxu0 %v1451
        %1543 = vmatprep.subr.mxu0 %v1455
        %1544 = vmatpush1.xpose.msra.mxu0 %v1454
        %1545 = vmatprep.subr.mxu0 %v1458
        %1546 = vmatpush1.xpose.msra.mxu0 %v1457
        %1547 = vmatprep.subr.mxu0 %v1461
        %1548 = vmatpush1.xpose.msra.mxu0 %v1460
        %1549 = vmatprep.subr.mxu0 %v1464
        %1550 = vmatpush1.xpose.msra.mxu0 %v1463
        %1551 = vmatprep.subr.mxu0 %v1467
        %1552 = vmatpush1.xpose.msra.mxu0 %v1466
        %1553 = vmatprep.subr.mxu0 %v1470
        %1554 = vmatpush1.xpose.msra.mxu0 %v1469
        %1555 = vmatprep.subr.mxu0 %v1473
        %1556 = vmatpush1.xpose.msra.mxu0 %v1472
        %1557 = vmatprep.subr.mxu0 %v1476
        %1558 = vmatpush1.xpose.msra.mxu0 %v1475
        %1559 = vmatprep.subr.mxu0 %v1479
        %1560 = vmatpush1.xpose.msra.mxu0 %v1478
        %1561 = vmatprep.subr.mxu0 %v1482
        %1562 = vmatpush1.xpose.msra.mxu0 %v1481
        %1563 = vmatprep.subr.mxu0 %v1485
        %1564 = vmatpush1.xpose.msra.mxu0 %v1484
        %1565 = vmatprep.subr.mxu0 %v1488
        %1566 = vmatpush1.xpose.msra.mxu0 %v1487
        %1567 = vmatprep.subr.mxu0 %v1491
        %1568 = vmatpush1.xpose.msra.mxu0 %v1490
        %1569 = vmatprep.subr.mxu0 %v1494
        %1570 = vmatpush1.xpose.msra.mxu0 %v1493
        %1571 = vmatprep.subr.mxu0 %v1497
        %1572 = vmatpush1.xpose.msra.mxu0 %v1496
        %1573 = vmatprep.subr.mxu0 %v1500
        %1574 = vmatpush1.xpose.msra.mxu0 %v1499
        %1575 = vmatprep.subr.mxu0 %v1503
        %1576 = vmatpush1.xpose.msra.mxu0 %v1502
        %1577 = vmatprep.subr.mxu0 %v1506
        %1578 = vmatpush1.xpose.msra.mxu0 %v1505
        %1579 = vmatprep.subr.mxu0 %v1509
        %1580 = vmatpush1.xpose.msra.mxu0 %v1508
        %1581 = vmatprep.subr.mxu0 %v1512
        %1582 = vmatpush1.xpose.msra.mxu0 %v1511
        %1583 = vmatprep.subr.mxu0 %v1515
        %1584 = vmatpush1.xpose.msra.mxu0 %v1514
        %1585 = vmatprep.subr.mxu0 %v1518
        %1586 = vmatpush1.xpose.msra.mxu0 %v1517
        %1587 = vmatprep.subr.mxu0 %v1521
        %1588 = vmatpush1.xpose.msra.mxu0 %v1520
        %1589 = vmatprep.subr.mxu0 %v1524
        %1590 = vmatpush1.xpose.msra.mxu0 %v1523
        %1591 = vmatprep.subr.mxu0 %v1527
        %1592 = vmatpush1.xpose.msra.mxu0 %v1526
        %1593 = vmatprep.subr.mxu0 %v1530
        %1594 = vmatpush1.xpose.msra.mxu0 %v1529
        %1595 = vmatprep.mubr.f32.mxu0 %v606
        %1596 = vmatmul.mubr.f32.gmra.mrb[0].mxu0 %v604
        %v1597 = vpop.f32.mrb[0].mxu0
        %v1598 = vadd.f32 0.0, %v1597
        %v1599 = vpop.f32.mrb[0].mxu0
        %v1600 = vadd.f32 0.0, %v1599
        %1601 = vmatprep.mubr.f32.mxu0 %v612
        %1602 = vmatmul.mubr.f32.gmra.mrb[0].mxu0 %v610
        %v1603 = vpop.f32.mrb[0].mxu0
        %v1604 = vadd.f32 0.0, %v1603
        %v1605 = vpop.f32.mrb[0].mxu0
        %v1606 = vadd.f32 0.0, %v1605
        %1607 = vmatprep.mubr.f32.mxu0 %v618
        %1608 = vmatmul.mubr.f32.gmra.mrb[0].mxu0 %v616
        %v1609 = vpop.f32.mrb[0].mxu0
        %v1610 = vadd.f32 0.0, %v1609
        %v1611 = vpop.f32.mrb[0].mxu0
        %v1612 = vadd.f32 0.0, %v1611
        %1613 = vmatprep.mubr.f32.mxu0 %v624
        %1614 = vmatmul.mubr.f32.gmra.mrb[0].mxu0 %v622
        %v1615 = vpop.f32.mrb[0].mxu0
        %v1616 = vadd.f32 0.0, %v1615
        %v1617 = vpop.f32.mrb[0].mxu0
        %v1618 = vadd.f32 0.0, %v1617
        %1619 = vdwg.mxu0
        %v1620 = vld [vmem:[#allocation2] sm:$0x1]
        %s1621 = vtos %v1620
        %v1622 = vstv %s1621
        %v1623 = vmul.f32 %v1622, %v1598
        %v1624 = vmul.f32 %v1622, %v1600
        %v1625 = vmul.f32 %v1622, %v1604
        %v1626 = vmul.f32 %v1622, %v1606
        %v1627 = vmul.f32 %v1622, %v1610
        %v1628 = vmul.f32 %v1622, %v1612
        %v1629 = vmul.f32 %v1622, %v1616
        %v1630 = vmul.f32 %v1622, %v1618
        %v1631 = vadd.f32 %v1623, %v326
        %v1632 = vadd.f32 %v1624, %v327
        %v1633 = vadd.f32 %v1625, %v328
        %v1634 = vadd.f32 %v1626, %v329
        %v1635 = vadd.f32 %v1627, %v330
        %v1636 = vadd.f32 %v1628, %v331
        %v1637 = vadd.f32 %v1629, %v332
        %v1638 = vadd.f32 %v1630, %v333
        %1639 = vst [vmem:[%s325] sm:$0xff] %v1631
        %1640 = vst [vmem:[%s325 + $0x8] sm:$0xff] %v1632
        %1641 = vst [vmem:[%s325 + $0x10] sm:$0xff] %v1633
        %1642 = vst [vmem:[%s325 + $0x18] sm:$0xff] %v1634
        %1643 = vst [vmem:[%s325 + $0x20] sm:$0xff] %v1635
        %1644 = vst [vmem:[%s325 + $0x28] sm:$0xff] %v1636
        %1645 = vst [vmem:[%s325 + $0x30] sm:$0xff] %v1637
        %1646 = vst [vmem:[%s325 + $0x38] sm:$0xff] %v1638
        %s1647 = sand.u32 %s208, 1
        %s1648 = scalar_lea.sflag [#allocation5], %s1647
        %s1649 = sand.u32 %s208, 1
        %s1650 = smul.addr %s1649, 64
        %s1651 = scalar_lea.vmem [#allocation6], %s1650
        // Predicated region
        $region57: #{tpu_custom_call.1} parent=51 // pred_check
          %p1652 = pneg %p218
        $region58: #{tpu_custom_call.1} parent=51 // pred_check_branch
          %1654 = sbr.rel (%p1652) target = $region60
        $region59: #{tpu_custom_call.1} parent=51 // pred_region
          %s1656 = ssub.s32 1024, 1024
          %1657 = vsyncadd %s1648, %s1656
          %s1658 = smul.addr %s27, 8
          %s1659 = smul.addr %s1658, 128
          %s1660 = scalar_lea.hbm %s8, %s1659
          %s1661 = sshll.u32 %s1651, 4
          %s1662 = int_to_ptr.vmem [resolvable:$true] %s1661
          %1667 = dma.vmem_to_hbm [thread:$0]  %s1662, 1024, %s1660, %s1648, 256, 256, 16
        $region60: #{tpu_custom_call.1} parent=51 // pred_fallthru
          _
      $region52: #{tpu_custom_call.1} parent=5 // pred_fallthru
        _
      %p1668 = scmp.le.s32.totalorder 2, %s22
      // Predicated region
      $region61: #{tpu_custom_call.1} parent=5 // pred_check
        %p1669 = pneg %p1668
      $region62: #{tpu_custom_call.1} parent=5 // pred_check_branch
        %1671 = sbr.rel (%p1669) target = $region64
      $region63: #{tpu_custom_call.1} parent=5 // pred_region
        %s1672 = ssub.s32 %s22, 2
        // Predicated region
        $region65: #{tpu_custom_call.1} parent=63 // pred_check
          %p1673 = pneg %p224
        $region66: #{tpu_custom_call.1} parent=63 // pred_check_branch
          %1675 = sbr.rel (%p1673) target = $region68
        $region67: #{tpu_custom_call.1} parent=63 // pred_region
          %s1676 = sand.u32 %s209, 1
          %s1677 = scalar_lea.sflag [#allocation5], %s1676
          %s1678 = sand.u32 %s209, 1
          %s1679 = smul.addr %s1678, 64
          %s1680 = scalar_lea.vmem [#allocation6], %s1679
          %1681 = dma.done %s1677, 1024
        $region68: #{tpu_custom_call.1} parent=63 // pred_fallthru
          _
      $region64: #{tpu_custom_call.1} parent=5 // pred_fallthru
        _
    $region6: #{tpu_custom_call.1} parent=1 // loop_footer
      %s26 = sadd.s32 1, %s22
    $region7: #{tpu_custom_call.1} parent=1 // loop_footer_branch
      %21 = sbr.rel target = $region3
    $region8: #{tpu_custom_call.1} parent=1 // loop_exit
      _
    %1682 = vsyncpa [#allocation4], 1
    %s1683 = scalar_lea.sflag [#allocation4], 1
    %1684 = vsyncpa %s1683, 1
    %1685 = vsyncpa [#allocation5], 1
    %s1686 = scalar_lea.sflag [#allocation5], 1
    %1687 = vsyncpa %s1686, 1

</llo_original>
